<compile_context>
chip_gen: v5e
topology: v5e:2x2
jax: 0.10.0
libtpu: 0.0.40
codegen_flags: <defaults>
</compile_context>

<pallas_src>
import math

import jax
import jax.numpy as jnp
from jax.experimental import pallas as pl
from jax.experimental.pallas import tpu as pltpu

HIDDEN = 768
LN_EPS = 1e-12


def _cbe_kernel(boxes_ref, w_ref, cat_slab_ref, ln_slab_ref, out_ref):
    """Per-tile: Linear(4->768) + periodic category/bias slab add + LayerNorm.

    boxes_ref    : (TILE_N, 4)      f32
    w_ref        : (4, HIDDEN)      f32   box_embedding.weight^T      (resident)
    cat_slab_ref : (UNIT, HIDDEN)   f32   tiled category table + bias (resident)
    ln_slab_ref  : (2, HIDDEN)      f32   rows = [ln_gamma, ln_beta]  (resident)
    out_ref      : (TILE_N, HIDDEN)
    """
    tile_n = boxes_ref.shape[0]
    unit = cat_slab_ref.shape[0]

    # Linear(4 -> 768) on the MXU (tiny K; rides in the HBM-bound slack).
    emb = jnp.dot(boxes_ref[...], w_ref[...],
                  preferred_element_type=jnp.float32,
                  precision=jax.lax.Precision.HIGHEST)

    # Category embedding + linear bias.  label(row r) = r % n_objs and the block
    # start is a multiple of n_objs, so the embedding gather collapses to adding
    # a (UNIT, HIDDEN) slab with period UNIT (= lcm(8, n_objs)) rows.
    emb = (emb.reshape(tile_n // unit, unit, HIDDEN)
           + cat_slab_ref[...][None, :, :]).reshape(tile_n, HIDDEN)

    # LayerNorm over the hidden dim, eps = 1e-12 (f32 math).
    mean = jnp.mean(emb, axis=-1, keepdims=True)
    centered = emb - mean
    var = jnp.mean(centered * centered, axis=-1, keepdims=True)
    normed = centered * jax.lax.rsqrt(var + LN_EPS)
    out_ref[...] = (normed * ln_slab_ref[0:1, :] + ln_slab_ref[1:2, :]).astype(out_ref.dtype)


def category_box_embeddings_forward(boxes, params, n_objs=6, *,
                                    tile_rows=2048, out_dtype=jnp.float32):
    """boxes: (B, T, O, 4) with O + 1 == n_objs.

    Returns (embeddings (B,T+1,O+1,768), boxes_out (B,T+1,O+1,4), box_labels (B,T+1,O+1)).
    Fast path: out_dtype=jnp.bfloat16 halves the dominant HBM write (~1.8x) if
    downstream accepts bf16 activations; LayerNorm math stays f32 either way.
    """
    B, T, O, _ = boxes.shape
    assert O + 1 == n_objs, "module requires O + 1 == n_objs for the frame-CLS concat"

    # --- glue: CLS-augmented boxes + labels (tiny, plain JAX) ----------------
    box_cls = jnp.array([0.0, 0.0, 1.0, 1.0], jnp.float32)
    frame_cls = jnp.zeros((n_objs, 4), jnp.float32).at[0].set(box_cls)

    box_cls_rep = jnp.broadcast_to(box_cls[None, None, None, :], (B, T, 1, 4))
    boxes_aug = jnp.concatenate([box_cls_rep, boxes.astype(jnp.float32)], axis=-2)
    frame_cls_rep = jnp.broadcast_to(frame_cls[None, None, :, :], (B, 1, n_objs, 4))
    boxes_aug = jnp.concatenate([boxes_aug, frame_cls_rep], axis=1)   # (B, T+1, n_objs, 4)

    box_labels = jnp.tile(jnp.arange(n_objs, dtype=jnp.int32)[None, None, :], (B, T + 1, 1))

    # --- flatten token axis (no pad / no slice in the common case) -----------
    N = B * (T + 1) * n_objs
    unit = math.lcm(8, n_objs)          # (8,128) rule + label periodicity

    boxes_flat = boxes_aug.reshape(N, 4)
    n_rows = N
    if n_rows < unit:                   # degenerate tiny input: pad to one unit
        boxes_flat = jnp.pad(boxes_flat, ((0, unit - n_rows), (0, 0)))
        n_rows = unit

    # tile_n: multiple of lcm(8, n_objs) (keeps (8,128) rule AND every block
    # start a multiple of n_objs), capped at ceil(n_rows/2) so grid >= 2
    # (both v7x TensorCores get work even for small N).
    tile_n = max(unit, (min(tile_rows, pl.cdiv(n_rows, 2)) // unit) * unit)
    assert tile_n % unit == 0
    grid = pl.cdiv(n_rows, tile_n)      # edge block (if any) is masked by Pallas

    # --- weights ---------------------------------------------------------------
    w = params["box_w"].astype(jnp.float32)                            # (4, HIDDEN)
    # Additive slab: tiled category table + linear bias, period = unit rows.
    cat_slab = (jnp.tile(params["category_table"].astype(jnp.float32),
                         (unit // n_objs, 1))
                + params["box_b"].astype(jnp.float32)[None, :])        # (unit, HIDDEN)
    ln_slab = jnp.stack([params["ln_gamma"], params["ln_beta"]],
                        axis=0).astype(jnp.float32)                    # (2, HIDDEN)

    out_bytes = jnp.dtype(out_dtype).itemsize
    cost = pl.CostEstimate(
        flops=2 * n_rows * 4 * HIDDEN + 9 * n_rows * HIDDEN,
        transcendentals=n_rows,
        bytes_accessed=(n_rows * 4 * 4 + n_rows * HIDDEN * out_bytes
                        + (4 + unit + 2) * HIDDEN * 4),
    )

    # VMEM budget: double-buffered output + boxes window (lanes pad 4 -> 128 in
    # VMEM) + resident weight/slab windows + ~3 full-tile f32 LN intermediates.
    vmem_need = (2 * tile_n * HIDDEN * out_bytes
                 + 2 * tile_n * 128 * 4
                 + 2 * (8 + unit + 8) * HIDDEN * 4
                 + 3 * tile_n * HIDDEN * 4)
    vmem_limit = int(min(max(vmem_need + (2 << 20), 16 << 20), 56 << 20))

    out_flat = pl.pallas_call(
        _cbe_kernel,
        out_shape=jax.ShapeDtypeStruct((n_rows, HIDDEN), out_dtype),
        grid_spec=pltpu.PrefetchScalarGridSpec(
            num_scalar_prefetch=0,
            grid=(grid,),
            in_specs=[
                pl.BlockSpec((tile_n, 4), lambda i: (i, 0)),       # boxes tile
                pl.BlockSpec((4, HIDDEN), lambda i: (0, 0)),       # W (resident)
                pl.BlockSpec((unit, HIDDEN), lambda i: (0, 0)),    # category+bias slab
                pl.BlockSpec((2, HIDDEN), lambda i: (0, 0)),       # gamma/beta
            ],
            out_specs=pl.BlockSpec((tile_n, HIDDEN), lambda i: (i, 0)),
        ),
        compiler_params=pltpu.CompilerParams(
            dimension_semantics=("parallel",),
            vmem_limit_bytes=vmem_limit),
        cost_estimate=cost,
    )(boxes_flat, w, cat_slab, ln_slab)

    if n_rows != N:                     # only for the tiny-input fallback
        out_flat = out_flat[:N]
    embeddings = out_flat.reshape(B, T + 1, n_objs, HIDDEN)
    # Dropout(0.1): identity in eval mode.
    return embeddings, boxes_aug, box_labels


def init_params(key, n_objs=6):
    k1, k2, k3 = jax.random.split(key, 3)
    box_w = 0.02 * jax.random.normal(k1, (4, HIDDEN), jnp.float32)    # Linear(4,768) weight^T
    box_b = 0.02 * jax.random.normal(k2, (HIDDEN,), jnp.float32)
    category_table = 0.02 * jax.random.normal(k3, (n_objs, HIDDEN), jnp.float32)
    category_table = category_table.at[0].set(0.0)                    # padding_idx=0
    ln_gamma = jnp.ones((HIDDEN,), jnp.float32)
    ln_beta = jnp.zeros((HIDDEN,), jnp.float32)
    return dict(box_w=box_w, box_b=box_b, category_table=category_table,
                ln_gamma=ln_gamma, ln_beta=ln_beta)


def _reference(boxes, params, n_objs=6):
    """Pure-JAX reference for correctness checking."""
    B, T, O, _ = boxes.shape
    box_cls = jnp.array([0.0, 0.0, 1.0, 1.0], jnp.float32)
    frame_cls = jnp.zeros((n_objs, 4), jnp.float32).at[0].set(box_cls)
    boxes_aug = jnp.concatenate(
        [jnp.broadcast_to(box_cls[None, None, None, :], (B, T, 1, 4)), boxes], axis=-2)
    boxes_aug = jnp.concatenate(
        [boxes_aug, jnp.broadcast_to(frame_cls[None, None, :, :], (B, 1, O + 1, 4))], axis=1)
    labels = jnp.tile(jnp.arange(O + 1)[None, None, :], (B, T + 1, 1))
    emb = (jnp.dot(boxes_aug, params["box_w"], precision=jax.lax.Precision.HIGHEST)
           + params["box_b"] + params["category_table"][labels])
    mean = emb.mean(-1, keepdims=True)
    var = ((emb - mean) ** 2).mean(-1, keepdims=True)
    return (emb - mean) * jax.lax.rsqrt(var + LN_EPS) * params["ln_gamma"] + params["ln_beta"]


if __name__ == "__main__":
    key = jax.random.PRNGKey(0)
    n_objs = 6
    B, T, O = 2, 4, n_objs - 1          # boxes (2,4,5,4) -> N = 60 (exercises the edge block)
    k_params, k_boxes = jax.random.split(key)
    params = init_params(k_params, n_objs)
    boxes = jax.random.uniform(k_boxes, (B, T, O, 4), jnp.float32)

    ref = _reference(boxes, params, n_objs)

    # f32 path (matches the PyTorch module's output dtype).
    emb_f32, boxes_out, box_labels = category_box_embeddings_forward(boxes, params, n_objs)
    jax.block_until_ready((emb_f32, boxes_out, box_labels))
    assert emb_f32.shape == (B, T + 1, O + 1, HIDDEN)
    assert boxes_out.shape == (B, T + 1, O + 1, 4)
    assert box_labels.shape == (B, T + 1, O + 1)
    assert jnp.allclose(emb_f32, ref, atol=1e-4, rtol=1e-4)

    # bf16 fast path (halves the dominant HBM write; looser tolerance for bf16 rounding).
    emb_bf16, _, _ = category_box_embeddings_forward(
        boxes, params, n_objs, out_dtype=jnp.bfloat16)
    jax.block_until_ready(emb_bf16)
    assert emb_bf16.dtype == jnp.bfloat16
    assert jnp.allclose(emb_bf16.astype(jnp.float32), ref, atol=3e-2, rtol=3e-2)

    print("KERNEL_OK")
</pallas_src>

<mosaic_0001>
module attributes {stable_mosaic.version = 11 : i64} {
  func.func @_cbe_kernel(%arg0: i32, %arg1: memref<24x4xf32, #tpu.memory_space<vmem>>, %arg2: memref<4x768xf32, #tpu.memory_space<vmem>>, %arg3: memref<24x768xf32, #tpu.memory_space<vmem>>, %arg4: memref<2x768xf32, #tpu.memory_space<vmem>>, %arg5: memref<24x768xf32, #tpu.memory_space<vmem>>) attributes {dimension_semantics = [#tpu.dimension_semantics<parallel>], iteration_bounds = array<i64: 3>, scalar_prefetch = 0 : i64, scratch_operands = 0 : i64, tpu.core_type = #tpu.core_type<tc>, window_params = [{transform_indices = @transform_0, window_bounds = array<i64: 24, 4>}, {pipeline_mode = #tpu.pipeline_mode<synchronous>, transform_indices = @transform_1, window_bounds = array<i64: 4, 768>}, {pipeline_mode = #tpu.pipeline_mode<synchronous>, transform_indices = @transform_2, window_bounds = array<i64: 24, 768>}, {pipeline_mode = #tpu.pipeline_mode<synchronous>, transform_indices = @transform_3, window_bounds = array<i64: 2, 768>}, {transform_indices = @transform_4, window_bounds = array<i64: 24, 768>}]} {
    %c0 = arith.constant 0 : index
    %c0_0 = arith.constant 0 : index
    %0 = vector.load %arg1[%c0, %c0_0] : memref<24x4xf32, #tpu.memory_space<vmem>>, vector<24x4xf32>
    %c0_1 = arith.constant 0 : index
    %c0_2 = arith.constant 0 : index
    %1 = vector.load %arg2[%c0_1, %c0_2] : memref<4x768xf32, #tpu.memory_space<vmem>>, vector<4x768xf32>
    %cst = arith.constant dense<0.000000e+00> : vector<24x768xf32>
    %2 = tpu.matmul %0, %1, %cst {dimension_numbers = #tpu.dot_dimension_numbers<[1], [0], [0], [1], [0, 0, 1, 1], [], []>, precision = #tpu.contract_precision<fp32>} : vector<24x4xf32>, vector<4x768xf32>, vector<24x768xf32> -> vector<24x768xf32>
    %3 = vector.shape_cast %2 : vector<24x768xf32> to vector<1x24x768xf32>
    %c0_3 = arith.constant 0 : index
    %c0_4 = arith.constant 0 : index
    %4 = vector.load %arg3[%c0_3, %c0_4] : memref<24x768xf32, #tpu.memory_space<vmem>>, vector<24x768xf32>
    %5 = vector.shape_cast %4 : vector<24x768xf32> to vector<1x24x768xf32>
    %6 = arith.addf %3, %5 : vector<1x24x768xf32>
    %7 = vector.shape_cast %6 : vector<1x24x768xf32> to vector<24x768xf32>
    %cst_5 = arith.constant dense<0.000000e+00> : vector<24xf32>
    %8 = vector.multi_reduction <add>, %7, %cst_5 [1] : vector<24x768xf32> to vector<24xf32>
    %9 = vector.shape_cast %8 : vector<24xf32> to vector<24x1xf32>
    %cst_6 = arith.constant 7.680000e+02 : f32
    %10 = vector.broadcast %cst_6 : f32 to vector<24x1xf32>
    %11 = arith.divf %9, %10 : vector<24x1xf32>
    %12 = vector.broadcast %11 : vector<24x1xf32> to vector<24x768xf32>
    %13 = arith.subf %7, %12 : vector<24x768xf32>
    %14 = arith.mulf %13, %13 : vector<24x768xf32>
    %cst_7 = arith.constant dense<0.000000e+00> : vector<24xf32>
    %15 = vector.multi_reduction <add>, %14, %cst_7 [1] : vector<24x768xf32> to vector<24xf32>
    %16 = vector.shape_cast %15 : vector<24xf32> to vector<24x1xf32>
    %cst_8 = arith.constant 7.680000e+02 : f32
    %17 = vector.broadcast %cst_8 : f32 to vector<24x1xf32>
    %18 = arith.divf %16, %17 : vector<24x1xf32>
    %cst_9 = arith.constant 9.99999996E-13 : f32
    %19 = vector.broadcast %cst_9 : f32 to vector<24x1xf32>
    %20 = arith.addf %18, %19 : vector<24x1xf32>
    %21 = math.rsqrt %20 : vector<24x1xf32>
    %22 = vector.broadcast %21 : vector<24x1xf32> to vector<24x768xf32>
    %23 = arith.mulf %13, %22 : vector<24x768xf32>
    %c0_10 = arith.constant 0 : index
    %c0_11 = arith.constant 0 : index
    %24 = vector.load %arg4[%c0_10, %c0_11] : memref<2x768xf32, #tpu.memory_space<vmem>>, vector<1x768xf32>
    %25 = vector.broadcast %24 : vector<1x768xf32> to vector<24x768xf32>
    %26 = arith.mulf %23, %25 : vector<24x768xf32>
    %c1 = arith.constant 1 : index
    %c0_12 = arith.constant 0 : index
    %27 = vector.load %arg4[%c1, %c0_12] : memref<2x768xf32, #tpu.memory_space<vmem>>, vector<1x768xf32>
    %28 = vector.broadcast %27 : vector<1x768xf32> to vector<24x768xf32>
    %29 = arith.addf %26, %28 : vector<24x768xf32>
    %c0_13 = arith.constant 0 : index
    %c0_14 = arith.constant 0 : index
    %30 = vector.load %arg5[%c0_13, %c0_14] : memref<24x768xf32, #tpu.memory_space<vmem>>, vector<24x768xf32>
    tpu.vector_store %arg5[%c0_13, %c0_14], %29 {strides = array<i32>} : memref<24x768xf32, #tpu.memory_space<vmem>>, vector<24x768xf32>,
    return
  }
  func.func @transform_0(%arg0: i32) -> (i32, i32) {
    %c0_i32 = arith.constant 0 : i32
    %c0_i32_0 = arith.constant 0 : i32
    return %arg0, %c0_i32 : i32, i32
  }
  func.func @transform_1(%arg0: i32) -> (i32, i32) {
    %c0_i32 = arith.constant 0 : i32
    %c0_i32_0 = arith.constant 0 : i32
    %c0_i32_1 = arith.constant 0 : i32
    return %c0_i32, %c0_i32_0 : i32, i32
  }
  func.func @transform_2(%arg0: i32) -> (i32, i32) {
    %c0_i32 = arith.constant 0 : i32
    %c0_i32_0 = arith.constant 0 : i32
    %c0_i32_1 = arith.constant 0 : i32
    return %c0_i32, %c0_i32_0 : i32, i32
  }
  func.func @transform_3(%arg0: i32) -> (i32, i32) {
    %c0_i32 = arith.constant 0 : i32
    %c0_i32_0 = arith.constant 0 : i32
    %c0_i32_1 = arith.constant 0 : i32
    return %c0_i32, %c0_i32_0 : i32, i32
  }
  func.func @transform_4(%arg0: i32) -> (i32, i32) {
    %c0_i32 = arith.constant 0 : i32
    %c0_i32_0 = arith.constant 0 : i32
    return %arg0, %c0_i32 : i32, i32
  }
}

</mosaic_0001>

<llo_original>
// kernel: tpu_custom_call.1
$region0: #{tpu_custom_call.1}
  #allocation0 [shape = 'u32[]', space=smem, size = 0x4, offset = 0x4, fixed_abs, tag = 'smem constant byte address 0x4 - core index']
  #allocation1 [shape = 'u32[72,128]{1,0:T(1,128)}', space=vmem, size = 0x9000, scoped, tag = 'internal scratch']
  %s0 = inlined_call_operand.vmem [shape: f32[60,4], index: 0, kind: input, shape index: {}]
  %s1 = inlined_call_operand.vmem [shape: f32[4,768], index: 1, kind: input, shape index: {}]
  %s2 = inlined_call_operand.hbm [shape: f32[24,768], index: 2, kind: input, shape index: {}]
  %s3 = inlined_call_operand.vmem [shape: f32[2,768], index: 3, kind: input, shape index: {}]
  %s4 = inlined_call_operand.hbm [shape: f32[60,768], index: 4, kind: output, shape index: {}]
  %s5 = sld [smem:[#allocation0]]
  $region53: #{tpu_custom_call.1} parent=0
    _
  %s7 = ssub.s32 1, %s5
  %s8 = scalar_select 0, %s7, %s5
  $region1: #{tpu_custom_call.1} parent=0
    #allocation2 [shape = 'u8[73728]{0}', space=vmem, size = 0x12000, scoped, tag = 'input window, operand 2, single buffered']
    #allocation3 [shape = 's32[2]{0}', space=sflag, size = 0x8, scoped, tag = 'scoped memory for tpu_custom_call.1']
    #allocation4 [shape = 's32[2]{0}', space=sflag, size = 0x8, scoped, tag = 'scoped memory for tpu_custom_call.1']
    #allocation5 [shape = 'u8[147456]{0}', space=vmem, size = 0x24000, scoped, tag = 'output window, operand 0']
    %9 = vsyncpa [#allocation3], 0
    %10 = vsyncpa [#allocation4], 0
    %s11 = scalar_lea.sflag [#allocation4], 1
    %12 = vsyncpa %s11, 0
    loop: start=0, step=1, limit=5
    $region2: #{tpu_custom_call.1} parent=1 // loop_pre_header
      _
    $region3: #{tpu_custom_call.1} parent=1 // loop_header
      %s14 = sphi 0, %s18
      %p15 = scmp.ge.s32.totalorder %s14, 5
      %s24 = sphi 0, %s26
      %s27 = sphi 0, %s24
      %s28 = sphi 0, %s27
      %s44 = sphi 0, %s28
      %s48 = sphi 0, %s48
      %s50 = sphi 0, %s48
      %s51 = sphi 0, %s50
      %s65 = sphi 0, %s51
      %s69 = sphi 0, %s69
      %s71 = sphi 0, %s69
      %s72 = sphi 0, %s71
      %s86 = sphi 0, %s72
      %s90 = sphi 0, %s90
      %s92 = sphi 0, %s90
      %s93 = sphi 0, %s92
      %s107 = sphi 0, %s93
      %s113 = sphi 0, %s115
      %s116 = sphi 0, %s113
      %s117 = sphi 0, %s116
      %s133 = sphi 0, %s117
    $region4: #{tpu_custom_call.1} parent=1 // loop_header_branch
      %17 = sbr.rel (%p15) target = $region8
    $region5: #{tpu_custom_call.1} parent=1 // loop_body
      %s19 = ssub.s32 %s14, 1
      %s20 = ssub.s32 %s14, 2
      %s21 = sadd.s32 %s14, 1
      %s22 = ssub.s32 %s14, %s21
      %p23 = scmp.eq.s32.totalorder %s22, 0
      %s25 = sadd.s32 %s24, 1
      %s26 = scalar_select %p23, %s24, %s25
      %p29 = pneg %p23
      %p30 = scmp.eq.s32.totalorder %s14, 2
      %p31 = por %p29, %p30
      %p32 = scmp.ne.s32.totalorder %s24, %s27
      %p33 = scmp.eq.s32.totalorder %s14, 0
      %p34 = por %p32, %p33
      %p35 = scmp.ne.s32.totalorder %s24, %s27
      %p36 = scmp.eq.s32.totalorder %s19, 2
      %p37 = por %p35, %p36
      %p38 = scmp.ne.s32.totalorder %s27, %s28
      %p39 = scmp.eq.s32.totalorder %s19, 0
      %p40 = por %p38, %p39
      %p41 = scmp.ne.s32.totalorder %s27, %s28
      %p42 = scmp.eq.s32.totalorder %s20, 2
      %p43 = por %p41, %p42
      %p45 = scmp.ne.s32.totalorder %s28, %s44
      %p46 = scmp.eq.s32.totalorder %s20, 0
      %p47 = por %p45, %p46
      %s49 = sadd.s32 %s48, 1
      %p52 = scmp.eq.s32.totalorder %s14, 2
      %p53 = scmp.ne.s32.totalorder %s48, %s50
      %p54 = scmp.eq.s32.totalorder %s14, 0
      %p55 = por %p53, %p54
      %p56 = scmp.ne.s32.totalorder %s48, %s50
      %p57 = scmp.eq.s32.totalorder %s19, 2
      %p58 = por %p56, %p57
      %p59 = scmp.ne.s32.totalorder %s50, %s51
      %p60 = scmp.eq.s32.totalorder %s19, 0
      %p61 = por %p59, %p60
      %p62 = scmp.ne.s32.totalorder %s50, %s51
      %p63 = scmp.eq.s32.totalorder %s20, 2
      %p64 = por %p62, %p63
      %p66 = scmp.ne.s32.totalorder %s51, %s65
      %p67 = scmp.eq.s32.totalorder %s20, 0
      %p68 = por %p66, %p67
      %s70 = sadd.s32 %s69, 1
      %p73 = scmp.eq.s32.totalorder %s14, 2
      %p74 = scmp.ne.s32.totalorder %s69, %s71
      %p75 = scmp.eq.s32.totalorder %s14, 0
      %p76 = por %p74, %p75
      %p77 = scmp.ne.s32.totalorder %s69, %s71
      %p78 = scmp.eq.s32.totalorder %s19, 2
      %p79 = por %p77, %p78
      %p80 = scmp.ne.s32.totalorder %s71, %s72
      %p81 = scmp.eq.s32.totalorder %s19, 0
      %p82 = por %p80, %p81
      %p83 = scmp.ne.s32.totalorder %s71, %s72
      %p84 = scmp.eq.s32.totalorder %s20, 2
      %p85 = por %p83, %p84
      %p87 = scmp.ne.s32.totalorder %s72, %s86
      %p88 = scmp.eq.s32.totalorder %s20, 0
      %p89 = por %p87, %p88
      %s91 = sadd.s32 %s90, 1
      %p94 = scmp.eq.s32.totalorder %s14, 2
      %p95 = scmp.ne.s32.totalorder %s90, %s92
      %p96 = scmp.eq.s32.totalorder %s14, 0
      %p97 = por %p95, %p96
      %p98 = scmp.ne.s32.totalorder %s90, %s92
      %p99 = scmp.eq.s32.totalorder %s19, 2
      %p100 = por %p98, %p99
      %p101 = scmp.ne.s32.totalorder %s92, %s93
      %p102 = scmp.eq.s32.totalorder %s19, 0
      %p103 = por %p101, %p102
      %p104 = scmp.ne.s32.totalorder %s92, %s93
      %p105 = scmp.eq.s32.totalorder %s20, 2
      %p106 = por %p104, %p105
      %p108 = scmp.ne.s32.totalorder %s93, %s107
      %p109 = scmp.eq.s32.totalorder %s20, 0
      %p110 = por %p108, %p109
      %s111 = ssub.s32 %s14, %s21
      %p112 = scmp.eq.s32.totalorder %s111, 0
      %s114 = sadd.s32 %s113, 1
      %s115 = scalar_select %p112, %s113, %s114
      %p118 = pneg %p112
      %p119 = scmp.eq.s32.totalorder %s14, 2
      %p120 = por %p118, %p119
      %p121 = scmp.ne.s32.totalorder %s113, %s116
      %p122 = scmp.eq.s32.totalorder %s14, 0
      %p123 = por %p121, %p122
      %p124 = scmp.ne.s32.totalorder %s113, %s116
      %p125 = scmp.eq.s32.totalorder %s19, 2
      %p126 = por %p124, %p125
      %p127 = scmp.ne.s32.totalorder %s116, %s117
      %p128 = scmp.eq.s32.totalorder %s19, 0
      %p129 = por %p127, %p128
      %p130 = scmp.ne.s32.totalorder %s116, %s117
      %p131 = scmp.eq.s32.totalorder %s20, 2
      %p132 = por %p130, %p131
      %p134 = scmp.ne.s32.totalorder %s117, %s133
      %p135 = scmp.eq.s32.totalorder %s20, 0
      %p136 = por %p134, %p135
      %p137 = scmp.le.s32.totalorder 1, %s14
      %p138 = scmp.lt.s32.totalorder %s14, 4
      %p139 = pnand %p137, %p138
      %p140 = pneg %p139
      // Predicated region
      $region9: #{tpu_custom_call.1} parent=5 // pred_check
        _
      $region10: #{tpu_custom_call.1} parent=5 // pred_check_branch
        %142 = sbr.rel (%p139) target = $region12
      $region11: #{tpu_custom_call.1} parent=5 // pred_region
        %s143 = ssub.s32 %s14, 1
        // Predicated region
        $region13: #{tpu_custom_call.1} parent=11 // pred_check
          %p144 = pneg %p61
        $region14: #{tpu_custom_call.1} parent=11 // pred_check_branch
          %146 = sbr.rel (%p144) target = $region16
        $region15: #{tpu_custom_call.1} parent=11 // pred_region
          _
        $region16: #{tpu_custom_call.1} parent=11 // pred_fallthru
          _
        // Predicated region
        $region17: #{tpu_custom_call.1} parent=11 // pred_check
          %p147 = pneg %p82
        $region18: #{tpu_custom_call.1} parent=11 // pred_check_branch
          %149 = sbr.rel (%p147) target = $region20
        $region19: #{tpu_custom_call.1} parent=11 // pred_region
          %151 = vsyncadd [#allocation3], 0
          %s152 = sshll.u32 %s2, 4
          %s153 = int_to_ptr.hbm [resolvable:$true] %s152
          %s154 = sshll.u32 [#allocation2], 4
          %s155 = int_to_ptr.vmem [resolvable:$true] %s154
          %160 = dma.hbm_to_vmem [thread:$0]  %s153, 2304, %s155, [#allocation3], 768, 768, 48
        $region20: #{tpu_custom_call.1} parent=11 // pred_fallthru
          _
        // Predicated region
        $region21: #{tpu_custom_call.1} parent=11 // pred_check
          %p161 = pneg %p103
        $region22: #{tpu_custom_call.1} parent=11 // pred_check_branch
          %163 = sbr.rel (%p161) target = $region24
        $region23: #{tpu_custom_call.1} parent=11 // pred_region
          _
        $region24: #{tpu_custom_call.1} parent=11 // pred_fallthru
          _
      $region12: #{tpu_custom_call.1} parent=5 // pred_fallthru
        _
      %p164 = scmp.lt.s32.totalorder %s14, 3
      // Predicated region
      $region25: #{tpu_custom_call.1} parent=5 // pred_check
        %p165 = pneg %p164
      $region26: #{tpu_custom_call.1} parent=5 // pred_check_branch
        %167 = sbr.rel (%p165) target = $region28
      $region27: #{tpu_custom_call.1} parent=5 // pred_region
        // Predicated region
        $region29: #{tpu_custom_call.1} parent=27 // pred_check
          %p168 = pneg %p34
        $region30: #{tpu_custom_call.1} parent=27 // pred_check_branch
          %170 = sbr.rel (%p168) target = $region32
        $region31: #{tpu_custom_call.1} parent=27 // pred_region
          %s171 = smul.u32 3, %s14
          %s172 = ssub.s32 8, %s171
          %p173 = scmp.lt.s32.totalorder %s172, 3
          %s174 = scalar_select %p173, %s172, 3
          %s175 = smul.u32 8, %s174
          %p176 = scmp.lt.s32.totalorder %s171, 7
          %s177 = scalar_select %p176, %s171, 7
          %s178 = smul.addr %s177, 8
          %s179 = scalar_lea.vmem %s0, %s178
          %s180 = smul.u32 3, %s14
          %s181 = ssub.s32 8, %s180
          %p182 = scmp.lt.s32.totalorder %s181, 3
          %s183 = scalar_select %p182, %s181, 3
          %s184 = smul.u32 8, %s183
        $region32: #{tpu_custom_call.1} parent=27 // pred_fallthru
          _
      $region28: #{tpu_custom_call.1} parent=5 // pred_fallthru
        _
      %p185 = scmp.le.s32.totalorder 1, %s14
      %p186 = scmp.lt.s32.totalorder %s14, 4
      %p187 = pnand %p185, %p186
      %p188 = pneg %p187
      // Predicated region
      $region33: #{tpu_custom_call.1} parent=5 // pred_check
        _
      $region34: #{tpu_custom_call.1} parent=5 // pred_check_branch
        %190 = sbr.rel (%p187) target = $region36
      $region35: #{tpu_custom_call.1} parent=5 // pred_region
        %s191 = ssub.s32 %s14, 1
        // Predicated region
        $region37: #{tpu_custom_call.1} parent=35 // pred_check
          %p192 = pneg %p82
        $region38: #{tpu_custom_call.1} parent=35 // pred_check_branch
          %194 = sbr.rel (%p192) target = $region40
        $region39: #{tpu_custom_call.1} parent=35 // pred_region
          %196 = dma.done [#allocation3], 2304
        $region40: #{tpu_custom_call.1} parent=35 // pred_fallthru
          _
        %s197 = smul.u32 3, %s19
        %s198 = ssub.s32 8, %s197
        %p199 = scmp.lt.s32.totalorder %s198, 3
        %s200 = scalar_select %p199, %s198, 3
        %s201 = smul.u32 8, %s200
        %p202 = scmp.lt.s32.totalorder %s197, 7
        %s203 = scalar_select %p202, %s197, 7
        %s204 = smul.addr %s203, 8
        %s205 = scalar_lea.vmem %s0, %s204
        %p206 = pneg %p40
        %p207 = pneg %p37
        %p208 = pneg %p61
        %p209 = pneg %p58
        %p210 = pneg %p82
        %p211 = pneg %p79
        %p212 = pneg %p103
        %p213 = pneg %p100
        %p214 = pneg %p129
        %p215 = pneg %p126
        %s216 = sand.u32 %s116, 1
        %s217 = scalar_lea.sflag [#allocation4], %s216
        %s218 = sand.u32 %s116, 1
        %s219 = smul.addr %s218, 144
        %s220 = scalar_lea.vmem [#allocation5], %s219
        %s221 = smul.u32 3, %s19
        %s222 = ssub.s32 8, %s221
        %p223 = scmp.lt.s32.totalorder %s222, 3
        %s224 = scalar_select %p223, %s222, 3
        %s225 = smul.u32 8, %s224
        %p226 = scmp.lt.s32.totalorder %s221, 7
        %s227 = scalar_select %p226, %s221, 7
        %s228 = smul.addr %s227, 8
        %s229 = scalar_lea.vmem %s0, %s228
        %s230 = smul.u32 3, %s19
        %s231 = ssub.s32 8, %s230
        %p232 = scmp.lt.s32.totalorder %s231, 3
        %s233 = scalar_select %p232, %s231, 3
        %s234 = smul.u32 8, %s233
        %s235 = smul.u32 3, %s19
        %s236 = ssub.s32 8, %s235
        %p237 = scmp.lt.s32.totalorder %s236, 3
        %s238 = scalar_select %p237, %s236, 3
        %s239 = smul.u32 8, %s238
        %s240 = smul.u32 %s239, 6
        %v241 = vld [vmem:[%s229] sm:$0xff]
        %v242 = vld [vmem:[%s229 + $0x8] sm:$0xff]
        %v243 = vld [vmem:[%s229 + $0x10] sm:$0xff]
        %v244 = vld [vmem:[%s1] sm:$0xff]
        %v245 = vld [vmem:[%s1 + $0x8] sm:$0xff]
        %v246 = vld [vmem:[%s1 + $0x10] sm:$0xff]
        %250 = vst [vmem:[#allocation1] ss:$2 sm:$0xff] %v244
        %s251 = scalar_lea.vmem [#allocation1], 16
        %252 = vst [vmem:[%s251] ss:$2 sm:$0xff] %v245
        %s253 = scalar_lea.vmem [#allocation1], 32
        %254 = vst [vmem:[%s253] ss:$2 sm:$0xff] %v246
        %v255 = vld.sshfl [vmem:[#allocation1] sm:$0xff pattern:$0x75316420]
        %v256 = vld.sshfl [vmem:[#allocation1 + $0x8] sm:$0xff pattern:$0x75316420]
        %v257 = vld.sshfl [vmem:[#allocation1 + $0x10] sm:$0xff pattern:$0x75316420]
        %v258 = vld.sshfl [vmem:[#allocation1 + $0x18] sm:$0xff pattern:$0x75316420]
        %v259 = vld.sshfl [vmem:[#allocation1 + $0x20] sm:$0xff pattern:$0x75316420]
        %v260 = vld.sshfl [vmem:[#allocation1 + $0x28] sm:$0xff pattern:$0x75316420]
        %vm261 = vcmask 31744
        %v263 = vsel %vm261, %v241, 0
        %v266 = vsel %vm261, %v242, 0
        %v269 = vsel %vm261, %v243, 0
        %vm271 = vcmask 1043456
        %v272 = vsel %vm271, %v255, 0
        %v274 = vsel %vm271, %v256, 0
        %v276 = vsel %vm271, %v257, 0
        %v278 = vsel %vm271, %v258, 0
        %v280 = vsel %vm271, %v259, 0
        %v282 = vsel %vm271, %v260, 0
        %284 = vmatpush.msra.mxu0 0.0
        %285 = vmatpush.msra.mxu0 0.0
        %286 = vmatpush.msra.mxu0 0.0
        %287 = vmatpush.msra.mxu0 0.0
        %288 = vmatpush.msra.mxu0 0.0
        %289 = vmatpush.msra.mxu0 0.0
        %290 = vmatpush.msra.mxu0 0.0
        %291 = vmatpush.msra.mxu0 0.0
        %292 = vmatpush.msra.mxu0 0.0
        %293 = vmatpush.msra.mxu0 0.0
        %294 = vmatpush.msra.mxu0 0.0
        %295 = vmatpush.msra.mxu0 0.0
        %296 = vmatpush.msra.mxu0 0.0
        %297 = vmatpush.msra.mxu0 0.0
        %298 = vmatpush.msra.mxu0 0.0
        %v299 = vand.u32 %v272, 4294901760
        %300 = vmatpush.msra.mxu0 %v299
        %v301 = vand.u32 %v263, 4294901760
        %v302 = vsub.f32 %v263, %v301
        %v303 = vand.u32 %v302, 4294901760
        %v304 = vsub.f32 %v302, %v303
        %v305 = vand.u32 %v304, 4294901760
        %306 = vmatmul.f32.gmra.mxu0 %v305
        %v307 = vpop.f32.mrf.mxu0
        %v308 = vadd.f32 0.0, %v307
        %v309 = vand.u32 %v266, 4294901760
        %v310 = vsub.f32 %v266, %v309
        %v311 = vand.u32 %v310, 4294901760
        %v312 = vsub.f32 %v310, %v311
        %v313 = vand.u32 %v312, 4294901760
        %314 = vmatmul.f32.gmra.mxu0 %v313
        %v315 = vpop.f32.mrf.mxu0
        %v316 = vadd.f32 0.0, %v315
        %v317 = vand.u32 %v269, 4294901760
        %v318 = vsub.f32 %v269, %v317
        %v319 = vand.u32 %v318, 4294901760
        %v320 = vsub.f32 %v318, %v319
        %v321 = vand.u32 %v320, 4294901760
        %322 = vmatmul.f32.gmra.mxu0 %v321
        %v323 = vpop.f32.mrf.mxu0
        %v324 = vadd.f32 0.0, %v323
        %325 = vdwg.mxu0
        %326 = vmatpush.msra.mxu0 0.0
        %327 = vmatpush.msra.mxu0 0.0
        %328 = vmatpush.msra.mxu0 0.0
        %329 = vmatpush.msra.mxu0 0.0
        %330 = vmatpush.msra.mxu0 0.0
        %331 = vmatpush.msra.mxu0 0.0
        %332 = vmatpush.msra.mxu0 0.0
        %333 = vmatpush.msra.mxu0 0.0
        %334 = vmatpush.msra.mxu0 0.0
        %335 = vmatpush.msra.mxu0 0.0
        %336 = vmatpush.msra.mxu0 0.0
        %337 = vmatpush.msra.mxu0 0.0
        %338 = vmatpush.msra.mxu0 0.0
        %339 = vmatpush.msra.mxu0 0.0
        %340 = vmatpush.msra.mxu0 0.0
        %v341 = vand.u32 %v272, 4294901760
        %v342 = vsub.f32 %v272, %v341
        %v343 = vand.u32 %v342, 4294901760
        %v344 = vsub.f32 %v342, %v343
        %v345 = vand.u32 %v344, 4294901760
        %346 = vmatpush.msra.mxu0 %v345
        %v347 = vand.u32 %v263, 4294901760
        %348 = vmatmul.f32.gmra.mxu0 %v347
        %v349 = vpop.f32.mrf.mxu0
        %v350 = vadd.f32 %v308, %v349
        %v351 = vand.u32 %v266, 4294901760
        %352 = vmatmul.f32.gmra.mxu0 %v351
        %v353 = vpop.f32.mrf.mxu0
        %v354 = vadd.f32 %v316, %v353
        %v355 = vand.u32 %v269, 4294901760
        %356 = vmatmul.f32.gmra.mxu0 %v355
        %v357 = vpop.f32.mrf.mxu0
        %v358 = vadd.f32 %v324, %v357
        %359 = vdwg.mxu0
        %360 = vmatpush.msra.mxu0 0.0
        %361 = vmatpush.msra.mxu0 0.0
        %362 = vmatpush.msra.mxu0 0.0
        %363 = vmatpush.msra.mxu0 0.0
        %364 = vmatpush.msra.mxu0 0.0
        %365 = vmatpush.msra.mxu0 0.0
        %366 = vmatpush.msra.mxu0 0.0
        %367 = vmatpush.msra.mxu0 0.0
        %368 = vmatpush.msra.mxu0 0.0
        %369 = vmatpush.msra.mxu0 0.0
        %370 = vmatpush.msra.mxu0 0.0
        %371 = vmatpush.msra.mxu0 0.0
        %372 = vmatpush.msra.mxu0 0.0
        %373 = vmatpush.msra.mxu0 0.0
        %374 = vmatpush.msra.mxu0 0.0
        %v375 = vand.u32 %v272, 4294901760
        %v376 = vsub.f32 %v272, %v375
        %377 = vmatpush.msra.mxu0 %v376
        %v378 = vand.u32 %v263, 4294901760
        %v379 = vsub.f32 %v263, %v378
        %380 = vmatmul.f32.gmra.mxu0 %v379
        %v381 = vpop.f32.mrf.mxu0
        %v382 = vadd.f32 %v350, %v381
        %v383 = vand.u32 %v266, 4294901760
        %v384 = vsub.f32 %v266, %v383
        %385 = vmatmul.f32.gmra.mxu0 %v384
        %v386 = vpop.f32.mrf.mxu0
        %v387 = vadd.f32 %v354, %v386
        %v388 = vand.u32 %v269, 4294901760
        %v389 = vsub.f32 %v269, %v388
        %390 = vmatmul.f32.gmra.mxu0 %v389
        %v391 = vpop.f32.mrf.mxu0
        %v392 = vadd.f32 %v358, %v391
        %393 = vdwg.mxu0
        %394 = vmatpush.msra.mxu0 0.0
        %395 = vmatpush.msra.mxu0 0.0
        %396 = vmatpush.msra.mxu0 0.0
        %397 = vmatpush.msra.mxu0 0.0
        %398 = vmatpush.msra.mxu0 0.0
        %399 = vmatpush.msra.mxu0 0.0
        %400 = vmatpush.msra.mxu0 0.0
        %401 = vmatpush.msra.mxu0 0.0
        %402 = vmatpush.msra.mxu0 0.0
        %403 = vmatpush.msra.mxu0 0.0
        %404 = vmatpush.msra.mxu0 0.0
        %405 = vmatpush.msra.mxu0 0.0
        %406 = vmatpush.msra.mxu0 0.0
        %407 = vmatpush.msra.mxu0 0.0
        %408 = vmatpush.msra.mxu0 0.0
        %v409 = vand.u32 %v272, 4294901760
        %410 = vmatpush.msra.mxu0 %v409
        %v411 = vand.u32 %v263, 4294901760
        %v412 = vsub.f32 %v263, %v411
        %v413 = vand.u32 %v412, 4294901760
        %414 = vmatmul.f32.gmra.mxu0 %v413
        %v415 = vpop.f32.mrf.mxu0
        %v416 = vadd.f32 %v382, %v415
        %v417 = vand.u32 %v266, 4294901760
        %v418 = vsub.f32 %v266, %v417
        %v419 = vand.u32 %v418, 4294901760
        %420 = vmatmul.f32.gmra.mxu0 %v419
        %v421 = vpop.f32.mrf.mxu0
        %v422 = vadd.f32 %v387, %v421
        %v423 = vand.u32 %v269, 4294901760
        %v424 = vsub.f32 %v269, %v423
        %v425 = vand.u32 %v424, 4294901760
        %426 = vmatmul.f32.gmra.mxu0 %v425
        %v427 = vpop.f32.mrf.mxu0
        %v428 = vadd.f32 %v392, %v427
        %429 = vdwg.mxu0
        %430 = vmatpush.msra.mxu0 0.0
        %431 = vmatpush.msra.mxu0 0.0
        %432 = vmatpush.msra.mxu0 0.0
        %433 = vmatpush.msra.mxu0 0.0
        %434 = vmatpush.msra.mxu0 0.0
        %435 = vmatpush.msra.mxu0 0.0
        %436 = vmatpush.msra.mxu0 0.0
        %437 = vmatpush.msra.mxu0 0.0
        %438 = vmatpush.msra.mxu0 0.0
        %439 = vmatpush.msra.mxu0 0.0
        %440 = vmatpush.msra.mxu0 0.0
        %441 = vmatpush.msra.mxu0 0.0
        %442 = vmatpush.msra.mxu0 0.0
        %443 = vmatpush.msra.mxu0 0.0
        %444 = vmatpush.msra.mxu0 0.0
        %v445 = vand.u32 %v272, 4294901760
        %v446 = vsub.f32 %v272, %v445
        %v447 = vand.u32 %v446, 4294901760
        %448 = vmatpush.msra.mxu0 %v447
        %v449 = vand.u32 %v263, 4294901760
        %450 = vmatmul.f32.gmra.mxu0 %v449
        %v451 = vpop.f32.mrf.mxu0
        %v452 = vadd.f32 %v416, %v451
        %v453 = vand.u32 %v266, 4294901760
        %454 = vmatmul.f32.gmra.mxu0 %v453
        %v455 = vpop.f32.mrf.mxu0
        %v456 = vadd.f32 %v422, %v455
        %v457 = vand.u32 %v269, 4294901760
        %458 = vmatmul.f32.gmra.mxu0 %v457
        %v459 = vpop.f32.mrf.mxu0
        %v460 = vadd.f32 %v428, %v459
        %461 = vdwg.mxu0
        %462 = vmatpush.msra.mxu0 0.0
        %463 = vmatpush.msra.mxu0 0.0
        %464 = vmatpush.msra.mxu0 0.0
        %465 = vmatpush.msra.mxu0 0.0
        %466 = vmatpush.msra.mxu0 0.0
        %467 = vmatpush.msra.mxu0 0.0
        %468 = vmatpush.msra.mxu0 0.0
        %469 = vmatpush.msra.mxu0 0.0
        %470 = vmatpush.msra.mxu0 0.0
        %471 = vmatpush.msra.mxu0 0.0
        %472 = vmatpush.msra.mxu0 0.0
        %473 = vmatpush.msra.mxu0 0.0
        %474 = vmatpush.msra.mxu0 0.0
        %475 = vmatpush.msra.mxu0 0.0
        %476 = vmatpush.msra.mxu0 0.0
        %v477 = vand.u32 %v272, 4294901760
        %478 = vmatpush.msra.mxu0 %v477
        %v479 = vand.u32 %v263, 4294901760
        %480 = vmatmul.f32.gmra.mxu0 %v479
        %v481 = vpop.f32.mrf.mxu0
        %v482 = vadd.f32 %v452, %v481
        %v483 = vand.u32 %v266, 4294901760
        %484 = vmatmul.f32.gmra.mxu0 %v483
        %v485 = vpop.f32.mrf.mxu0
        %v486 = vadd.f32 %v456, %v485
        %v487 = vand.u32 %v269, 4294901760
        %488 = vmatmul.f32.gmra.mxu0 %v487
        %v489 = vpop.f32.mrf.mxu0
        %v490 = vadd.f32 %v460, %v489
        %491 = vdwg.mxu0
        %492 = vmatpush.msra.mxu0 0.0
        %493 = vmatpush.msra.mxu0 0.0
        %494 = vmatpush.msra.mxu0 0.0
        %495 = vmatpush.msra.mxu0 0.0
        %496 = vmatpush.msra.mxu0 0.0
        %497 = vmatpush.msra.mxu0 0.0
        %498 = vmatpush.msra.mxu0 0.0
        %499 = vmatpush.msra.mxu0 0.0
        %500 = vmatpush.msra.mxu0 0.0
        %501 = vmatpush.msra.mxu0 0.0
        %502 = vmatpush.msra.mxu0 0.0
        %503 = vmatpush.msra.mxu0 0.0
        %504 = vmatpush.msra.mxu0 0.0
        %505 = vmatpush.msra.mxu0 0.0
        %506 = vmatpush.msra.mxu0 0.0
        %v507 = vand.u32 %v274, 4294901760
        %508 = vmatpush.msra.mxu0 %v507
        %v509 = vand.u32 %v263, 4294901760
        %v510 = vsub.f32 %v263, %v509
        %v511 = vand.u32 %v510, 4294901760
        %v512 = vsub.f32 %v510, %v511
        %v513 = vand.u32 %v512, 4294901760
        %514 = vmatmul.f32.gmra.mxu0 %v513
        %v515 = vpop.f32.mrf.mxu0
        %v516 = vadd.f32 0.0, %v515
        %v517 = vand.u32 %v266, 4294901760
        %v518 = vsub.f32 %v266, %v517
        %v519 = vand.u32 %v518, 4294901760
        %v520 = vsub.f32 %v518, %v519
        %v521 = vand.u32 %v520, 4294901760
        %522 = vmatmul.f32.gmra.mxu0 %v521
        %v523 = vpop.f32.mrf.mxu0
        %v524 = vadd.f32 0.0, %v523
        %v525 = vand.u32 %v269, 4294901760
        %v526 = vsub.f32 %v269, %v525
        %v527 = vand.u32 %v526, 4294901760
        %v528 = vsub.f32 %v526, %v527
        %v529 = vand.u32 %v528, 4294901760
        %530 = vmatmul.f32.gmra.mxu0 %v529
        %v531 = vpop.f32.mrf.mxu0
        %v532 = vadd.f32 0.0, %v531
        %533 = vdwg.mxu0
        %534 = vmatpush.msra.mxu0 0.0
        %535 = vmatpush.msra.mxu0 0.0
        %536 = vmatpush.msra.mxu0 0.0
        %537 = vmatpush.msra.mxu0 0.0
        %538 = vmatpush.msra.mxu0 0.0
        %539 = vmatpush.msra.mxu0 0.0
        %540 = vmatpush.msra.mxu0 0.0
        %541 = vmatpush.msra.mxu0 0.0
        %542 = vmatpush.msra.mxu0 0.0
        %543 = vmatpush.msra.mxu0 0.0
        %544 = vmatpush.msra.mxu0 0.0
        %545 = vmatpush.msra.mxu0 0.0
        %546 = vmatpush.msra.mxu0 0.0
        %547 = vmatpush.msra.mxu0 0.0
        %548 = vmatpush.msra.mxu0 0.0
        %v549 = vand.u32 %v274, 4294901760
        %v550 = vsub.f32 %v274, %v549
        %v551 = vand.u32 %v550, 4294901760
        %v552 = vsub.f32 %v550, %v551
        %v553 = vand.u32 %v552, 4294901760
        %554 = vmatpush.msra.mxu0 %v553
        %v555 = vand.u32 %v263, 4294901760
        %556 = vmatmul.f32.gmra.mxu0 %v555
        %v557 = vpop.f32.mrf.mxu0
        %v558 = vadd.f32 %v516, %v557
        %v559 = vand.u32 %v266, 4294901760
        %560 = vmatmul.f32.gmra.mxu0 %v559
        %v561 = vpop.f32.mrf.mxu0
        %v562 = vadd.f32 %v524, %v561
        %v563 = vand.u32 %v269, 4294901760
        %564 = vmatmul.f32.gmra.mxu0 %v563
        %v565 = vpop.f32.mrf.mxu0
        %v566 = vadd.f32 %v532, %v565
        %567 = vdwg.mxu0
        %568 = vmatpush.msra.mxu0 0.0
        %569 = vmatpush.msra.mxu0 0.0
        %570 = vmatpush.msra.mxu0 0.0
        %571 = vmatpush.msra.mxu0 0.0
        %572 = vmatpush.msra.mxu0 0.0
        %573 = vmatpush.msra.mxu0 0.0
        %574 = vmatpush.msra.mxu0 0.0
        %575 = vmatpush.msra.mxu0 0.0
        %576 = vmatpush.msra.mxu0 0.0
        %577 = vmatpush.msra.mxu0 0.0
        %578 = vmatpush.msra.mxu0 0.0
        %579 = vmatpush.msra.mxu0 0.0
        %580 = vmatpush.msra.mxu0 0.0
        %581 = vmatpush.msra.mxu0 0.0
        %582 = vmatpush.msra.mxu0 0.0
        %v583 = vand.u32 %v274, 4294901760
        %v584 = vsub.f32 %v274, %v583
        %585 = vmatpush.msra.mxu0 %v584
        %v586 = vand.u32 %v263, 4294901760
        %v587 = vsub.f32 %v263, %v586
        %588 = vmatmul.f32.gmra.mxu0 %v587
        %v589 = vpop.f32.mrf.mxu0
        %v590 = vadd.f32 %v558, %v589
        %v591 = vand.u32 %v266, 4294901760
        %v592 = vsub.f32 %v266, %v591
        %593 = vmatmul.f32.gmra.mxu0 %v592
        %v594 = vpop.f32.mrf.mxu0
        %v595 = vadd.f32 %v562, %v594
        %v596 = vand.u32 %v269, 4294901760
        %v597 = vsub.f32 %v269, %v596
        %598 = vmatmul.f32.gmra.mxu0 %v597
        %v599 = vpop.f32.mrf.mxu0
        %v600 = vadd.f32 %v566, %v599
        %601 = vdwg.mxu0
        %602 = vmatpush.msra.mxu0 0.0
        %603 = vmatpush.msra.mxu0 0.0
        %604 = vmatpush.msra.mxu0 0.0
        %605 = vmatpush.msra.mxu0 0.0
        %606 = vmatpush.msra.mxu0 0.0
        %607 = vmatpush.msra.mxu0 0.0
        %608 = vmatpush.msra.mxu0 0.0
        %609 = vmatpush.msra.mxu0 0.0
        %610 = vmatpush.msra.mxu0 0.0
        %611 = vmatpush.msra.mxu0 0.0
        %612 = vmatpush.msra.mxu0 0.0
        %613 = vmatpush.msra.mxu0 0.0
        %614 = vmatpush.msra.mxu0 0.0
        %615 = vmatpush.msra.mxu0 0.0
        %616 = vmatpush.msra.mxu0 0.0
        %v617 = vand.u32 %v274, 4294901760
        %618 = vmatpush.msra.mxu0 %v617
        %v619 = vand.u32 %v263, 4294901760
        %v620 = vsub.f32 %v263, %v619
        %v621 = vand.u32 %v620, 4294901760
        %622 = vmatmul.f32.gmra.mxu0 %v621
        %v623 = vpop.f32.mrf.mxu0
        %v624 = vadd.f32 %v590, %v623
        %v625 = vand.u32 %v266, 4294901760
        %v626 = vsub.f32 %v266, %v625
        %v627 = vand.u32 %v626, 4294901760
        %628 = vmatmul.f32.gmra.mxu0 %v627
        %v629 = vpop.f32.mrf.mxu0
        %v630 = vadd.f32 %v595, %v629
        %v631 = vand.u32 %v269, 4294901760
        %v632 = vsub.f32 %v269, %v631
        %v633 = vand.u32 %v632, 4294901760
        %634 = vmatmul.f32.gmra.mxu0 %v633
        %v635 = vpop.f32.mrf.mxu0
        %v636 = vadd.f32 %v600, %v635
        %637 = vdwg.mxu0
        %638 = vmatpush.msra.mxu0 0.0
        %639 = vmatpush.msra.mxu0 0.0
        %640 = vmatpush.msra.mxu0 0.0
        %641 = vmatpush.msra.mxu0 0.0
        %642 = vmatpush.msra.mxu0 0.0
        %643 = vmatpush.msra.mxu0 0.0
        %644 = vmatpush.msra.mxu0 0.0
        %645 = vmatpush.msra.mxu0 0.0
        %646 = vmatpush.msra.mxu0 0.0
        %647 = vmatpush.msra.mxu0 0.0
        %648 = vmatpush.msra.mxu0 0.0
        %649 = vmatpush.msra.mxu0 0.0
        %650 = vmatpush.msra.mxu0 0.0
        %651 = vmatpush.msra.mxu0 0.0
        %652 = vmatpush.msra.mxu0 0.0
        %v653 = vand.u32 %v274, 4294901760
        %v654 = vsub.f32 %v274, %v653
        %v655 = vand.u32 %v654, 4294901760
        %656 = vmatpush.msra.mxu0 %v655
        %v657 = vand.u32 %v263, 4294901760
        %658 = vmatmul.f32.gmra.mxu0 %v657
        %v659 = vpop.f32.mrf.mxu0
        %v660 = vadd.f32 %v624, %v659
        %v661 = vand.u32 %v266, 4294901760
        %662 = vmatmul.f32.gmra.mxu0 %v661
        %v663 = vpop.f32.mrf.mxu0
        %v664 = vadd.f32 %v630, %v663
        %v665 = vand.u32 %v269, 4294901760
        %666 = vmatmul.f32.gmra.mxu0 %v665
        %v667 = vpop.f32.mrf.mxu0
        %v668 = vadd.f32 %v636, %v667
        %669 = vdwg.mxu0
        %670 = vmatpush.msra.mxu0 0.0
        %671 = vmatpush.msra.mxu0 0.0
        %672 = vmatpush.msra.mxu0 0.0
        %673 = vmatpush.msra.mxu0 0.0
        %674 = vmatpush.msra.mxu0 0.0
        %675 = vmatpush.msra.mxu0 0.0
        %676 = vmatpush.msra.mxu0 0.0
        %677 = vmatpush.msra.mxu0 0.0
        %678 = vmatpush.msra.mxu0 0.0
        %679 = vmatpush.msra.mxu0 0.0
        %680 = vmatpush.msra.mxu0 0.0
        %681 = vmatpush.msra.mxu0 0.0
        %682 = vmatpush.msra.mxu0 0.0
        %683 = vmatpush.msra.mxu0 0.0
        %684 = vmatpush.msra.mxu0 0.0
        %v685 = vand.u32 %v274, 4294901760
        %686 = vmatpush.msra.mxu0 %v685
        %v687 = vand.u32 %v263, 4294901760
        %688 = vmatmul.f32.gmra.mxu0 %v687
        %v689 = vpop.f32.mrf.mxu0
        %v690 = vadd.f32 %v660, %v689
        %v691 = vand.u32 %v266, 4294901760
        %692 = vmatmul.f32.gmra.mxu0 %v691
        %v693 = vpop.f32.mrf.mxu0
        %v694 = vadd.f32 %v664, %v693
        %v695 = vand.u32 %v269, 4294901760
        %696 = vmatmul.f32.gmra.mxu0 %v695
        %v697 = vpop.f32.mrf.mxu0
        %v698 = vadd.f32 %v668, %v697
        %699 = vdwg.mxu0
        %700 = vmatpush.msra.mxu0 0.0
        %701 = vmatpush.msra.mxu0 0.0
        %702 = vmatpush.msra.mxu0 0.0
        %703 = vmatpush.msra.mxu0 0.0
        %704 = vmatpush.msra.mxu0 0.0
        %705 = vmatpush.msra.mxu0 0.0
        %706 = vmatpush.msra.mxu0 0.0
        %707 = vmatpush.msra.mxu0 0.0
        %708 = vmatpush.msra.mxu0 0.0
        %709 = vmatpush.msra.mxu0 0.0
        %710 = vmatpush.msra.mxu0 0.0
        %711 = vmatpush.msra.mxu0 0.0
        %712 = vmatpush.msra.mxu0 0.0
        %713 = vmatpush.msra.mxu0 0.0
        %714 = vmatpush.msra.mxu0 0.0
        %v715 = vand.u32 %v276, 4294901760
        %716 = vmatpush.msra.mxu0 %v715
        %v717 = vand.u32 %v263, 4294901760
        %v718 = vsub.f32 %v263, %v717
        %v719 = vand.u32 %v718, 4294901760
        %v720 = vsub.f32 %v718, %v719
        %v721 = vand.u32 %v720, 4294901760
        %722 = vmatmul.f32.gmra.mxu0 %v721
        %v723 = vpop.f32.mrf.mxu0
        %v724 = vadd.f32 0.0, %v723
        %v725 = vand.u32 %v266, 4294901760
        %v726 = vsub.f32 %v266, %v725
        %v727 = vand.u32 %v726, 4294901760
        %v728 = vsub.f32 %v726, %v727
        %v729 = vand.u32 %v728, 4294901760
        %730 = vmatmul.f32.gmra.mxu0 %v729
        %v731 = vpop.f32.mrf.mxu0
        %v732 = vadd.f32 0.0, %v731
        %v733 = vand.u32 %v269, 4294901760
        %v734 = vsub.f32 %v269, %v733
        %v735 = vand.u32 %v734, 4294901760
        %v736 = vsub.f32 %v734, %v735
        %v737 = vand.u32 %v736, 4294901760
        %738 = vmatmul.f32.gmra.mxu0 %v737
        %v739 = vpop.f32.mrf.mxu0
        %v740 = vadd.f32 0.0, %v739
        %741 = vdwg.mxu0
        %742 = vmatpush.msra.mxu0 0.0
        %743 = vmatpush.msra.mxu0 0.0
        %744 = vmatpush.msra.mxu0 0.0
        %745 = vmatpush.msra.mxu0 0.0
        %746 = vmatpush.msra.mxu0 0.0
        %747 = vmatpush.msra.mxu0 0.0
        %748 = vmatpush.msra.mxu0 0.0
        %749 = vmatpush.msra.mxu0 0.0
        %750 = vmatpush.msra.mxu0 0.0
        %751 = vmatpush.msra.mxu0 0.0
        %752 = vmatpush.msra.mxu0 0.0
        %753 = vmatpush.msra.mxu0 0.0
        %754 = vmatpush.msra.mxu0 0.0
        %755 = vmatpush.msra.mxu0 0.0
        %756 = vmatpush.msra.mxu0 0.0
        %v757 = vand.u32 %v276, 4294901760
        %v758 = vsub.f32 %v276, %v757
        %v759 = vand.u32 %v758, 4294901760
        %v760 = vsub.f32 %v758, %v759
        %v761 = vand.u32 %v760, 4294901760
        %762 = vmatpush.msra.mxu0 %v761
        %v763 = vand.u32 %v263, 4294901760
        %764 = vmatmul.f32.gmra.mxu0 %v763
        %v765 = vpop.f32.mrf.mxu0
        %v766 = vadd.f32 %v724, %v765
        %v767 = vand.u32 %v266, 4294901760
        %768 = vmatmul.f32.gmra.mxu0 %v767
        %v769 = vpop.f32.mrf.mxu0
        %v770 = vadd.f32 %v732, %v769
        %v771 = vand.u32 %v269, 4294901760
        %772 = vmatmul.f32.gmra.mxu0 %v771
        %v773 = vpop.f32.mrf.mxu0
        %v774 = vadd.f32 %v740, %v773
        %775 = vdwg.mxu0
        %776 = vmatpush.msra.mxu0 0.0
        %777 = vmatpush.msra.mxu0 0.0
        %778 = vmatpush.msra.mxu0 0.0
        %779 = vmatpush.msra.mxu0 0.0
        %780 = vmatpush.msra.mxu0 0.0
        %781 = vmatpush.msra.mxu0 0.0
        %782 = vmatpush.msra.mxu0 0.0
        %783 = vmatpush.msra.mxu0 0.0
        %784 = vmatpush.msra.mxu0 0.0
        %785 = vmatpush.msra.mxu0 0.0
        %786 = vmatpush.msra.mxu0 0.0
        %787 = vmatpush.msra.mxu0 0.0
        %788 = vmatpush.msra.mxu0 0.0
        %789 = vmatpush.msra.mxu0 0.0
        %790 = vmatpush.msra.mxu0 0.0
        %v791 = vand.u32 %v276, 4294901760
        %v792 = vsub.f32 %v276, %v791
        %793 = vmatpush.msra.mxu0 %v792
        %v794 = vand.u32 %v263, 4294901760
        %v795 = vsub.f32 %v263, %v794
        %796 = vmatmul.f32.gmra.mxu0 %v795
        %v797 = vpop.f32.mrf.mxu0
        %v798 = vadd.f32 %v766, %v797
        %v799 = vand.u32 %v266, 4294901760
        %v800 = vsub.f32 %v266, %v799
        %801 = vmatmul.f32.gmra.mxu0 %v800
        %v802 = vpop.f32.mrf.mxu0
        %v803 = vadd.f32 %v770, %v802
        %v804 = vand.u32 %v269, 4294901760
        %v805 = vsub.f32 %v269, %v804
        %806 = vmatmul.f32.gmra.mxu0 %v805
        %v807 = vpop.f32.mrf.mxu0
        %v808 = vadd.f32 %v774, %v807
        %809 = vdwg.mxu0
        %810 = vmatpush.msra.mxu0 0.0
        %811 = vmatpush.msra.mxu0 0.0
        %812 = vmatpush.msra.mxu0 0.0
        %813 = vmatpush.msra.mxu0 0.0
        %814 = vmatpush.msra.mxu0 0.0
        %815 = vmatpush.msra.mxu0 0.0
        %816 = vmatpush.msra.mxu0 0.0
        %817 = vmatpush.msra.mxu0 0.0
        %818 = vmatpush.msra.mxu0 0.0
        %819 = vmatpush.msra.mxu0 0.0
        %820 = vmatpush.msra.mxu0 0.0
        %821 = vmatpush.msra.mxu0 0.0
        %822 = vmatpush.msra.mxu0 0.0
        %823 = vmatpush.msra.mxu0 0.0
        %824 = vmatpush.msra.mxu0 0.0
        %v825 = vand.u32 %v276, 4294901760
        %826 = vmatpush.msra.mxu0 %v825
        %v827 = vand.u32 %v263, 4294901760
        %v828 = vsub.f32 %v263, %v827
        %v829 = vand.u32 %v828, 4294901760
        %830 = vmatmul.f32.gmra.mxu0 %v829
        %v831 = vpop.f32.mrf.mxu0
        %v832 = vadd.f32 %v798, %v831
        %v833 = vand.u32 %v266, 4294901760
        %v834 = vsub.f32 %v266, %v833
        %v835 = vand.u32 %v834, 4294901760
        %836 = vmatmul.f32.gmra.mxu0 %v835
        %v837 = vpop.f32.mrf.mxu0
        %v838 = vadd.f32 %v803, %v837
        %v839 = vand.u32 %v269, 4294901760
        %v840 = vsub.f32 %v269, %v839
        %v841 = vand.u32 %v840, 4294901760
        %842 = vmatmul.f32.gmra.mxu0 %v841
        %v843 = vpop.f32.mrf.mxu0
        %v844 = vadd.f32 %v808, %v843
        %845 = vdwg.mxu0
        %846 = vmatpush.msra.mxu0 0.0
        %847 = vmatpush.msra.mxu0 0.0
        %848 = vmatpush.msra.mxu0 0.0
        %849 = vmatpush.msra.mxu0 0.0
        %850 = vmatpush.msra.mxu0 0.0
        %851 = vmatpush.msra.mxu0 0.0
        %852 = vmatpush.msra.mxu0 0.0
        %853 = vmatpush.msra.mxu0 0.0
        %854 = vmatpush.msra.mxu0 0.0
        %855 = vmatpush.msra.mxu0 0.0
        %856 = vmatpush.msra.mxu0 0.0
        %857 = vmatpush.msra.mxu0 0.0
        %858 = vmatpush.msra.mxu0 0.0
        %859 = vmatpush.msra.mxu0 0.0
        %860 = vmatpush.msra.mxu0 0.0
        %v861 = vand.u32 %v276, 4294901760
        %v862 = vsub.f32 %v276, %v861
        %v863 = vand.u32 %v862, 4294901760
        %864 = vmatpush.msra.mxu0 %v863
        %v865 = vand.u32 %v263, 4294901760
        %866 = vmatmul.f32.gmra.mxu0 %v865
        %v867 = vpop.f32.mrf.mxu0
        %v868 = vadd.f32 %v832, %v867
        %v869 = vand.u32 %v266, 4294901760
        %870 = vmatmul.f32.gmra.mxu0 %v869
        %v871 = vpop.f32.mrf.mxu0
        %v872 = vadd.f32 %v838, %v871
        %v873 = vand.u32 %v269, 4294901760
        %874 = vmatmul.f32.gmra.mxu0 %v873
        %v875 = vpop.f32.mrf.mxu0
        %v876 = vadd.f32 %v844, %v875
        %877 = vdwg.mxu0
        %878 = vmatpush.msra.mxu0 0.0
        %879 = vmatpush.msra.mxu0 0.0
        %880 = vmatpush.msra.mxu0 0.0
        %881 = vmatpush.msra.mxu0 0.0
        %882 = vmatpush.msra.mxu0 0.0
        %883 = vmatpush.msra.mxu0 0.0
        %884 = vmatpush.msra.mxu0 0.0
        %885 = vmatpush.msra.mxu0 0.0
        %886 = vmatpush.msra.mxu0 0.0
        %887 = vmatpush.msra.mxu0 0.0
        %888 = vmatpush.msra.mxu0 0.0
        %889 = vmatpush.msra.mxu0 0.0
        %890 = vmatpush.msra.mxu0 0.0
        %891 = vmatpush.msra.mxu0 0.0
        %892 = vmatpush.msra.mxu0 0.0
        %v893 = vand.u32 %v276, 4294901760
        %894 = vmatpush.msra.mxu0 %v893
        %v895 = vand.u32 %v263, 4294901760
        %896 = vmatmul.f32.gmra.mxu0 %v895
        %v897 = vpop.f32.mrf.mxu0
        %v898 = vadd.f32 %v868, %v897
        %v899 = vand.u32 %v266, 4294901760
        %900 = vmatmul.f32.gmra.mxu0 %v899
        %v901 = vpop.f32.mrf.mxu0
        %v902 = vadd.f32 %v872, %v901
        %v903 = vand.u32 %v269, 4294901760
        %904 = vmatmul.f32.gmra.mxu0 %v903
        %v905 = vpop.f32.mrf.mxu0
        %v906 = vadd.f32 %v876, %v905
        %907 = vdwg.mxu0
        %908 = vmatpush.msra.mxu0 0.0
        %909 = vmatpush.msra.mxu0 0.0
        %910 = vmatpush.msra.mxu0 0.0
        %911 = vmatpush.msra.mxu0 0.0
        %912 = vmatpush.msra.mxu0 0.0
        %913 = vmatpush.msra.mxu0 0.0
        %914 = vmatpush.msra.mxu0 0.0
        %915 = vmatpush.msra.mxu0 0.0
        %916 = vmatpush.msra.mxu0 0.0
        %917 = vmatpush.msra.mxu0 0.0
        %918 = vmatpush.msra.mxu0 0.0
        %919 = vmatpush.msra.mxu0 0.0
        %920 = vmatpush.msra.mxu0 0.0
        %921 = vmatpush.msra.mxu0 0.0
        %922 = vmatpush.msra.mxu0 0.0
        %v923 = vand.u32 %v278, 4294901760
        %924 = vmatpush.msra.mxu0 %v923
        %v925 = vand.u32 %v263, 4294901760
        %v926 = vsub.f32 %v263, %v925
        %v927 = vand.u32 %v926, 4294901760
        %v928 = vsub.f32 %v926, %v927
        %v929 = vand.u32 %v928, 4294901760
        %930 = vmatmul.f32.gmra.mxu0 %v929
        %v931 = vpop.f32.mrf.mxu0
        %v932 = vadd.f32 0.0, %v931
        %v933 = vand.u32 %v266, 4294901760
        %v934 = vsub.f32 %v266, %v933
        %v935 = vand.u32 %v934, 4294901760
        %v936 = vsub.f32 %v934, %v935
        %v937 = vand.u32 %v936, 4294901760
        %938 = vmatmul.f32.gmra.mxu0 %v937
        %v939 = vpop.f32.mrf.mxu0
        %v940 = vadd.f32 0.0, %v939
        %v941 = vand.u32 %v269, 4294901760
        %v942 = vsub.f32 %v269, %v941
        %v943 = vand.u32 %v942, 4294901760
        %v944 = vsub.f32 %v942, %v943
        %v945 = vand.u32 %v944, 4294901760
        %946 = vmatmul.f32.gmra.mxu0 %v945
        %v947 = vpop.f32.mrf.mxu0
        %v948 = vadd.f32 0.0, %v947
        %949 = vdwg.mxu0
        %950 = vmatpush.msra.mxu0 0.0
        %951 = vmatpush.msra.mxu0 0.0
        %952 = vmatpush.msra.mxu0 0.0
        %953 = vmatpush.msra.mxu0 0.0
        %954 = vmatpush.msra.mxu0 0.0
        %955 = vmatpush.msra.mxu0 0.0
        %956 = vmatpush.msra.mxu0 0.0
        %957 = vmatpush.msra.mxu0 0.0
        %958 = vmatpush.msra.mxu0 0.0
        %959 = vmatpush.msra.mxu0 0.0
        %960 = vmatpush.msra.mxu0 0.0
        %961 = vmatpush.msra.mxu0 0.0
        %962 = vmatpush.msra.mxu0 0.0
        %963 = vmatpush.msra.mxu0 0.0
        %964 = vmatpush.msra.mxu0 0.0
        %v965 = vand.u32 %v278, 4294901760
        %v966 = vsub.f32 %v278, %v965
        %v967 = vand.u32 %v966, 4294901760
        %v968 = vsub.f32 %v966, %v967
        %v969 = vand.u32 %v968, 4294901760
        %970 = vmatpush.msra.mxu0 %v969
        %v971 = vand.u32 %v263, 4294901760
        %972 = vmatmul.f32.gmra.mxu0 %v971
        %v973 = vpop.f32.mrf.mxu0
        %v974 = vadd.f32 %v932, %v973
        %v975 = vand.u32 %v266, 4294901760
        %976 = vmatmul.f32.gmra.mxu0 %v975
        %v977 = vpop.f32.mrf.mxu0
        %v978 = vadd.f32 %v940, %v977
        %v979 = vand.u32 %v269, 4294901760
        %980 = vmatmul.f32.gmra.mxu0 %v979
        %v981 = vpop.f32.mrf.mxu0
        %v982 = vadd.f32 %v948, %v981
        %983 = vdwg.mxu0
        %984 = vmatpush.msra.mxu0 0.0
        %985 = vmatpush.msra.mxu0 0.0
        %986 = vmatpush.msra.mxu0 0.0
        %987 = vmatpush.msra.mxu0 0.0
        %988 = vmatpush.msra.mxu0 0.0
        %989 = vmatpush.msra.mxu0 0.0
        %990 = vmatpush.msra.mxu0 0.0
        %991 = vmatpush.msra.mxu0 0.0
        %992 = vmatpush.msra.mxu0 0.0
        %993 = vmatpush.msra.mxu0 0.0
        %994 = vmatpush.msra.mxu0 0.0
        %995 = vmatpush.msra.mxu0 0.0
        %996 = vmatpush.msra.mxu0 0.0
        %997 = vmatpush.msra.mxu0 0.0
        %998 = vmatpush.msra.mxu0 0.0
        %v999 = vand.u32 %v278, 4294901760
        %v1000 = vsub.f32 %v278, %v999
        %1001 = vmatpush.msra.mxu0 %v1000
        %v1002 = vand.u32 %v263, 4294901760
        %v1003 = vsub.f32 %v263, %v1002
        %1004 = vmatmul.f32.gmra.mxu0 %v1003
        %v1005 = vpop.f32.mrf.mxu0
        %v1006 = vadd.f32 %v974, %v1005
        %v1007 = vand.u32 %v266, 4294901760
        %v1008 = vsub.f32 %v266, %v1007
        %1009 = vmatmul.f32.gmra.mxu0 %v1008
        %v1010 = vpop.f32.mrf.mxu0
        %v1011 = vadd.f32 %v978, %v1010
        %v1012 = vand.u32 %v269, 4294901760
        %v1013 = vsub.f32 %v269, %v1012
        %1014 = vmatmul.f32.gmra.mxu0 %v1013
        %v1015 = vpop.f32.mrf.mxu0
        %v1016 = vadd.f32 %v982, %v1015
        %1017 = vdwg.mxu0
        %1018 = vmatpush.msra.mxu0 0.0
        %1019 = vmatpush.msra.mxu0 0.0
        %1020 = vmatpush.msra.mxu0 0.0
        %1021 = vmatpush.msra.mxu0 0.0
        %1022 = vmatpush.msra.mxu0 0.0
        %1023 = vmatpush.msra.mxu0 0.0
        %1024 = vmatpush.msra.mxu0 0.0
        %1025 = vmatpush.msra.mxu0 0.0
        %1026 = vmatpush.msra.mxu0 0.0
        %1027 = vmatpush.msra.mxu0 0.0
        %1028 = vmatpush.msra.mxu0 0.0
        %1029 = vmatpush.msra.mxu0 0.0
        %1030 = vmatpush.msra.mxu0 0.0
        %1031 = vmatpush.msra.mxu0 0.0
        %1032 = vmatpush.msra.mxu0 0.0
        %v1033 = vand.u32 %v278, 4294901760
        %1034 = vmatpush.msra.mxu0 %v1033
        %v1035 = vand.u32 %v263, 4294901760
        %v1036 = vsub.f32 %v263, %v1035
        %v1037 = vand.u32 %v1036, 4294901760
        %1038 = vmatmul.f32.gmra.mxu0 %v1037
        %v1039 = vpop.f32.mrf.mxu0
        %v1040 = vadd.f32 %v1006, %v1039
        %v1041 = vand.u32 %v266, 4294901760
        %v1042 = vsub.f32 %v266, %v1041
        %v1043 = vand.u32 %v1042, 4294901760
        %1044 = vmatmul.f32.gmra.mxu0 %v1043
        %v1045 = vpop.f32.mrf.mxu0
        %v1046 = vadd.f32 %v1011, %v1045
        %v1047 = vand.u32 %v269, 4294901760
        %v1048 = vsub.f32 %v269, %v1047
        %v1049 = vand.u32 %v1048, 4294901760
        %1050 = vmatmul.f32.gmra.mxu0 %v1049
        %v1051 = vpop.f32.mrf.mxu0
        %v1052 = vadd.f32 %v1016, %v1051
        %1053 = vdwg.mxu0
        %1054 = vmatpush.msra.mxu0 0.0
        %1055 = vmatpush.msra.mxu0 0.0
        %1056 = vmatpush.msra.mxu0 0.0
        %1057 = vmatpush.msra.mxu0 0.0
        %1058 = vmatpush.msra.mxu0 0.0
        %1059 = vmatpush.msra.mxu0 0.0
        %1060 = vmatpush.msra.mxu0 0.0
        %1061 = vmatpush.msra.mxu0 0.0
        %1062 = vmatpush.msra.mxu0 0.0
        %1063 = vmatpush.msra.mxu0 0.0
        %1064 = vmatpush.msra.mxu0 0.0
        %1065 = vmatpush.msra.mxu0 0.0
        %1066 = vmatpush.msra.mxu0 0.0
        %1067 = vmatpush.msra.mxu0 0.0
        %1068 = vmatpush.msra.mxu0 0.0
        %v1069 = vand.u32 %v278, 4294901760
        %v1070 = vsub.f32 %v278, %v1069
        %v1071 = vand.u32 %v1070, 4294901760
        %1072 = vmatpush.msra.mxu0 %v1071
        %v1073 = vand.u32 %v263, 4294901760
        %1074 = vmatmul.f32.gmra.mxu0 %v1073
        %v1075 = vpop.f32.mrf.mxu0
        %v1076 = vadd.f32 %v1040, %v1075
        %v1077 = vand.u32 %v266, 4294901760
        %1078 = vmatmul.f32.gmra.mxu0 %v1077
        %v1079 = vpop.f32.mrf.mxu0
        %v1080 = vadd.f32 %v1046, %v1079
        %v1081 = vand.u32 %v269, 4294901760
        %1082 = vmatmul.f32.gmra.mxu0 %v1081
        %v1083 = vpop.f32.mrf.mxu0
        %v1084 = vadd.f32 %v1052, %v1083
        %1085 = vdwg.mxu0
        %1086 = vmatpush.msra.mxu0 0.0
        %1087 = vmatpush.msra.mxu0 0.0
        %1088 = vmatpush.msra.mxu0 0.0
        %1089 = vmatpush.msra.mxu0 0.0
        %1090 = vmatpush.msra.mxu0 0.0
        %1091 = vmatpush.msra.mxu0 0.0
        %1092 = vmatpush.msra.mxu0 0.0
        %1093 = vmatpush.msra.mxu0 0.0
        %1094 = vmatpush.msra.mxu0 0.0
        %1095 = vmatpush.msra.mxu0 0.0
        %1096 = vmatpush.msra.mxu0 0.0
        %1097 = vmatpush.msra.mxu0 0.0
        %1098 = vmatpush.msra.mxu0 0.0
        %1099 = vmatpush.msra.mxu0 0.0
        %1100 = vmatpush.msra.mxu0 0.0
        %v1101 = vand.u32 %v278, 4294901760
        %1102 = vmatpush.msra.mxu0 %v1101
        %v1103 = vand.u32 %v263, 4294901760
        %1104 = vmatmul.f32.gmra.mxu0 %v1103
        %v1105 = vpop.f32.mrf.mxu0
        %v1106 = vadd.f32 %v1076, %v1105
        %v1107 = vand.u32 %v266, 4294901760
        %1108 = vmatmul.f32.gmra.mxu0 %v1107
        %v1109 = vpop.f32.mrf.mxu0
        %v1110 = vadd.f32 %v1080, %v1109
        %v1111 = vand.u32 %v269, 4294901760
        %1112 = vmatmul.f32.gmra.mxu0 %v1111
        %v1113 = vpop.f32.mrf.mxu0
        %v1114 = vadd.f32 %v1084, %v1113
        %1115 = vdwg.mxu0
        %1116 = vmatpush.msra.mxu0 0.0
        %1117 = vmatpush.msra.mxu0 0.0
        %1118 = vmatpush.msra.mxu0 0.0
        %1119 = vmatpush.msra.mxu0 0.0
        %1120 = vmatpush.msra.mxu0 0.0
        %1121 = vmatpush.msra.mxu0 0.0
        %1122 = vmatpush.msra.mxu0 0.0
        %1123 = vmatpush.msra.mxu0 0.0
        %1124 = vmatpush.msra.mxu0 0.0
        %1125 = vmatpush.msra.mxu0 0.0
        %1126 = vmatpush.msra.mxu0 0.0
        %1127 = vmatpush.msra.mxu0 0.0
        %1128 = vmatpush.msra.mxu0 0.0
        %1129 = vmatpush.msra.mxu0 0.0
        %1130 = vmatpush.msra.mxu0 0.0
        %v1131 = vand.u32 %v280, 4294901760
        %1132 = vmatpush.msra.mxu0 %v1131
        %v1133 = vand.u32 %v263, 4294901760
        %v1134 = vsub.f32 %v263, %v1133
        %v1135 = vand.u32 %v1134, 4294901760
        %v1136 = vsub.f32 %v1134, %v1135
        %v1137 = vand.u32 %v1136, 4294901760
        %1138 = vmatmul.f32.gmra.mxu0 %v1137
        %v1139 = vpop.f32.mrf.mxu0
        %v1140 = vadd.f32 0.0, %v1139
        %v1141 = vand.u32 %v266, 4294901760
        %v1142 = vsub.f32 %v266, %v1141
        %v1143 = vand.u32 %v1142, 4294901760
        %v1144 = vsub.f32 %v1142, %v1143
        %v1145 = vand.u32 %v1144, 4294901760
        %1146 = vmatmul.f32.gmra.mxu0 %v1145
        %v1147 = vpop.f32.mrf.mxu0
        %v1148 = vadd.f32 0.0, %v1147
        %v1149 = vand.u32 %v269, 4294901760
        %v1150 = vsub.f32 %v269, %v1149
        %v1151 = vand.u32 %v1150, 4294901760
        %v1152 = vsub.f32 %v1150, %v1151
        %v1153 = vand.u32 %v1152, 4294901760
        %1154 = vmatmul.f32.gmra.mxu0 %v1153
        %v1155 = vpop.f32.mrf.mxu0
        %v1156 = vadd.f32 0.0, %v1155
        %1157 = vdwg.mxu0
        %1158 = vmatpush.msra.mxu0 0.0
        %1159 = vmatpush.msra.mxu0 0.0
        %1160 = vmatpush.msra.mxu0 0.0
        %1161 = vmatpush.msra.mxu0 0.0
        %1162 = vmatpush.msra.mxu0 0.0
        %1163 = vmatpush.msra.mxu0 0.0
        %1164 = vmatpush.msra.mxu0 0.0
        %1165 = vmatpush.msra.mxu0 0.0
        %1166 = vmatpush.msra.mxu0 0.0
        %1167 = vmatpush.msra.mxu0 0.0
        %1168 = vmatpush.msra.mxu0 0.0
        %1169 = vmatpush.msra.mxu0 0.0
        %1170 = vmatpush.msra.mxu0 0.0
        %1171 = vmatpush.msra.mxu0 0.0
        %1172 = vmatpush.msra.mxu0 0.0
        %v1173 = vand.u32 %v280, 4294901760
        %v1174 = vsub.f32 %v280, %v1173
        %v1175 = vand.u32 %v1174, 4294901760
        %v1176 = vsub.f32 %v1174, %v1175
        %v1177 = vand.u32 %v1176, 4294901760
        %1178 = vmatpush.msra.mxu0 %v1177
        %v1179 = vand.u32 %v263, 4294901760
        %1180 = vmatmul.f32.gmra.mxu0 %v1179
        %v1181 = vpop.f32.mrf.mxu0
        %v1182 = vadd.f32 %v1140, %v1181
        %v1183 = vand.u32 %v266, 4294901760
        %1184 = vmatmul.f32.gmra.mxu0 %v1183
        %v1185 = vpop.f32.mrf.mxu0
        %v1186 = vadd.f32 %v1148, %v1185
        %v1187 = vand.u32 %v269, 4294901760
        %1188 = vmatmul.f32.gmra.mxu0 %v1187
        %v1189 = vpop.f32.mrf.mxu0
        %v1190 = vadd.f32 %v1156, %v1189
        %1191 = vdwg.mxu0
        %1192 = vmatpush.msra.mxu0 0.0
        %1193 = vmatpush.msra.mxu0 0.0
        %1194 = vmatpush.msra.mxu0 0.0
        %1195 = vmatpush.msra.mxu0 0.0
        %1196 = vmatpush.msra.mxu0 0.0
        %1197 = vmatpush.msra.mxu0 0.0
        %1198 = vmatpush.msra.mxu0 0.0
        %1199 = vmatpush.msra.mxu0 0.0
        %1200 = vmatpush.msra.mxu0 0.0
        %1201 = vmatpush.msra.mxu0 0.0
        %1202 = vmatpush.msra.mxu0 0.0
        %1203 = vmatpush.msra.mxu0 0.0
        %1204 = vmatpush.msra.mxu0 0.0
        %1205 = vmatpush.msra.mxu0 0.0
        %1206 = vmatpush.msra.mxu0 0.0
        %v1207 = vand.u32 %v280, 4294901760
        %v1208 = vsub.f32 %v280, %v1207
        %1209 = vmatpush.msra.mxu0 %v1208
        %v1210 = vand.u32 %v263, 4294901760
        %v1211 = vsub.f32 %v263, %v1210
        %1212 = vmatmul.f32.gmra.mxu0 %v1211
        %v1213 = vpop.f32.mrf.mxu0
        %v1214 = vadd.f32 %v1182, %v1213
        %v1215 = vand.u32 %v266, 4294901760
        %v1216 = vsub.f32 %v266, %v1215
        %1217 = vmatmul.f32.gmra.mxu0 %v1216
        %v1218 = vpop.f32.mrf.mxu0
        %v1219 = vadd.f32 %v1186, %v1218
        %v1220 = vand.u32 %v269, 4294901760
        %v1221 = vsub.f32 %v269, %v1220
        %1222 = vmatmul.f32.gmra.mxu0 %v1221
        %v1223 = vpop.f32.mrf.mxu0
        %v1224 = vadd.f32 %v1190, %v1223
        %1225 = vdwg.mxu0
        %1226 = vmatpush.msra.mxu0 0.0
        %1227 = vmatpush.msra.mxu0 0.0
        %1228 = vmatpush.msra.mxu0 0.0
        %1229 = vmatpush.msra.mxu0 0.0
        %1230 = vmatpush.msra.mxu0 0.0
        %1231 = vmatpush.msra.mxu0 0.0
        %1232 = vmatpush.msra.mxu0 0.0
        %1233 = vmatpush.msra.mxu0 0.0
        %1234 = vmatpush.msra.mxu0 0.0
        %1235 = vmatpush.msra.mxu0 0.0
        %1236 = vmatpush.msra.mxu0 0.0
        %1237 = vmatpush.msra.mxu0 0.0
        %1238 = vmatpush.msra.mxu0 0.0
        %1239 = vmatpush.msra.mxu0 0.0
        %1240 = vmatpush.msra.mxu0 0.0
        %v1241 = vand.u32 %v280, 4294901760
        %1242 = vmatpush.msra.mxu0 %v1241
        %v1243 = vand.u32 %v263, 4294901760
        %v1244 = vsub.f32 %v263, %v1243
        %v1245 = vand.u32 %v1244, 4294901760
        %1246 = vmatmul.f32.gmra.mxu0 %v1245
        %v1247 = vpop.f32.mrf.mxu0
        %v1248 = vadd.f32 %v1214, %v1247
        %v1249 = vand.u32 %v266, 4294901760
        %v1250 = vsub.f32 %v266, %v1249
        %v1251 = vand.u32 %v1250, 4294901760
        %1252 = vmatmul.f32.gmra.mxu0 %v1251
        %v1253 = vpop.f32.mrf.mxu0
        %v1254 = vadd.f32 %v1219, %v1253
        %v1255 = vand.u32 %v269, 4294901760
        %v1256 = vsub.f32 %v269, %v1255
        %v1257 = vand.u32 %v1256, 4294901760
        %1258 = vmatmul.f32.gmra.mxu0 %v1257
        %v1259 = vpop.f32.mrf.mxu0
        %v1260 = vadd.f32 %v1224, %v1259
        %1261 = vdwg.mxu0
        %1262 = vmatpush.msra.mxu0 0.0
        %1263 = vmatpush.msra.mxu0 0.0
        %1264 = vmatpush.msra.mxu0 0.0
        %1265 = vmatpush.msra.mxu0 0.0
        %1266 = vmatpush.msra.mxu0 0.0
        %1267 = vmatpush.msra.mxu0 0.0
        %1268 = vmatpush.msra.mxu0 0.0
        %1269 = vmatpush.msra.mxu0 0.0
        %1270 = vmatpush.msra.mxu0 0.0
        %1271 = vmatpush.msra.mxu0 0.0
        %1272 = vmatpush.msra.mxu0 0.0
        %1273 = vmatpush.msra.mxu0 0.0
        %1274 = vmatpush.msra.mxu0 0.0
        %1275 = vmatpush.msra.mxu0 0.0
        %1276 = vmatpush.msra.mxu0 0.0
        %v1277 = vand.u32 %v280, 4294901760
        %v1278 = vsub.f32 %v280, %v1277
        %v1279 = vand.u32 %v1278, 4294901760
        %1280 = vmatpush.msra.mxu0 %v1279
        %v1281 = vand.u32 %v263, 4294901760
        %1282 = vmatmul.f32.gmra.mxu0 %v1281
        %v1283 = vpop.f32.mrf.mxu0
        %v1284 = vadd.f32 %v1248, %v1283
        %v1285 = vand.u32 %v266, 4294901760
        %1286 = vmatmul.f32.gmra.mxu0 %v1285
        %v1287 = vpop.f32.mrf.mxu0
        %v1288 = vadd.f32 %v1254, %v1287
        %v1289 = vand.u32 %v269, 4294901760
        %1290 = vmatmul.f32.gmra.mxu0 %v1289
        %v1291 = vpop.f32.mrf.mxu0
        %v1292 = vadd.f32 %v1260, %v1291
        %1293 = vdwg.mxu0
        %1294 = vmatpush.msra.mxu0 0.0
        %1295 = vmatpush.msra.mxu0 0.0
        %1296 = vmatpush.msra.mxu0 0.0
        %1297 = vmatpush.msra.mxu0 0.0
        %1298 = vmatpush.msra.mxu0 0.0
        %1299 = vmatpush.msra.mxu0 0.0
        %1300 = vmatpush.msra.mxu0 0.0
        %1301 = vmatpush.msra.mxu0 0.0
        %1302 = vmatpush.msra.mxu0 0.0
        %1303 = vmatpush.msra.mxu0 0.0
        %1304 = vmatpush.msra.mxu0 0.0
        %1305 = vmatpush.msra.mxu0 0.0
        %1306 = vmatpush.msra.mxu0 0.0
        %1307 = vmatpush.msra.mxu0 0.0
        %1308 = vmatpush.msra.mxu0 0.0
        %v1309 = vand.u32 %v280, 4294901760
        %1310 = vmatpush.msra.mxu0 %v1309
        %v1311 = vand.u32 %v263, 4294901760
        %1312 = vmatmul.f32.gmra.mxu0 %v1311
        %v1313 = vpop.f32.mrf.mxu0
        %v1314 = vadd.f32 %v1284, %v1313
        %v1315 = vand.u32 %v266, 4294901760
        %1316 = vmatmul.f32.gmra.mxu0 %v1315
        %v1317 = vpop.f32.mrf.mxu0
        %v1318 = vadd.f32 %v1288, %v1317
        %v1319 = vand.u32 %v269, 4294901760
        %1320 = vmatmul.f32.gmra.mxu0 %v1319
        %v1321 = vpop.f32.mrf.mxu0
        %v1322 = vadd.f32 %v1292, %v1321
        %1323 = vdwg.mxu0
        %1324 = vmatpush.msra.mxu0 0.0
        %1325 = vmatpush.msra.mxu0 0.0
        %1326 = vmatpush.msra.mxu0 0.0
        %1327 = vmatpush.msra.mxu0 0.0
        %1328 = vmatpush.msra.mxu0 0.0
        %1329 = vmatpush.msra.mxu0 0.0
        %1330 = vmatpush.msra.mxu0 0.0
        %1331 = vmatpush.msra.mxu0 0.0
        %1332 = vmatpush.msra.mxu0 0.0
        %1333 = vmatpush.msra.mxu0 0.0
        %1334 = vmatpush.msra.mxu0 0.0
        %1335 = vmatpush.msra.mxu0 0.0
        %1336 = vmatpush.msra.mxu0 0.0
        %1337 = vmatpush.msra.mxu0 0.0
        %1338 = vmatpush.msra.mxu0 0.0
        %v1339 = vand.u32 %v282, 4294901760
        %1340 = vmatpush.msra.mxu0 %v1339
        %v1341 = vand.u32 %v263, 4294901760
        %v1342 = vsub.f32 %v263, %v1341
        %v1343 = vand.u32 %v1342, 4294901760
        %v1344 = vsub.f32 %v1342, %v1343
        %v1345 = vand.u32 %v1344, 4294901760
        %1346 = vmatmul.f32.gmra.mxu0 %v1345
        %v1347 = vpop.f32.mrf.mxu0
        %v1348 = vadd.f32 0.0, %v1347
        %v1349 = vand.u32 %v266, 4294901760
        %v1350 = vsub.f32 %v266, %v1349
        %v1351 = vand.u32 %v1350, 4294901760
        %v1352 = vsub.f32 %v1350, %v1351
        %v1353 = vand.u32 %v1352, 4294901760
        %1354 = vmatmul.f32.gmra.mxu0 %v1353
        %v1355 = vpop.f32.mrf.mxu0
        %v1356 = vadd.f32 0.0, %v1355
        %v1357 = vand.u32 %v269, 4294901760
        %v1358 = vsub.f32 %v269, %v1357
        %v1359 = vand.u32 %v1358, 4294901760
        %v1360 = vsub.f32 %v1358, %v1359
        %v1361 = vand.u32 %v1360, 4294901760
        %1362 = vmatmul.f32.gmra.mxu0 %v1361
        %v1363 = vpop.f32.mrf.mxu0
        %v1364 = vadd.f32 0.0, %v1363
        %1365 = vdwg.mxu0
        %1366 = vmatpush.msra.mxu0 0.0
        %1367 = vmatpush.msra.mxu0 0.0
        %1368 = vmatpush.msra.mxu0 0.0
        %1369 = vmatpush.msra.mxu0 0.0
        %1370 = vmatpush.msra.mxu0 0.0
        %1371 = vmatpush.msra.mxu0 0.0
        %1372 = vmatpush.msra.mxu0 0.0
        %1373 = vmatpush.msra.mxu0 0.0
        %1374 = vmatpush.msra.mxu0 0.0
        %1375 = vmatpush.msra.mxu0 0.0
        %1376 = vmatpush.msra.mxu0 0.0
        %1377 = vmatpush.msra.mxu0 0.0
        %1378 = vmatpush.msra.mxu0 0.0
        %1379 = vmatpush.msra.mxu0 0.0
        %1380 = vmatpush.msra.mxu0 0.0
        %v1381 = vand.u32 %v282, 4294901760
        %v1382 = vsub.f32 %v282, %v1381
        %v1383 = vand.u32 %v1382, 4294901760
        %v1384 = vsub.f32 %v1382, %v1383
        %v1385 = vand.u32 %v1384, 4294901760
        %1386 = vmatpush.msra.mxu0 %v1385
        %v1387 = vand.u32 %v263, 4294901760
        %1388 = vmatmul.f32.gmra.mxu0 %v1387
        %v1389 = vpop.f32.mrf.mxu0
        %v1390 = vadd.f32 %v1348, %v1389
        %v1391 = vand.u32 %v266, 4294901760
        %1392 = vmatmul.f32.gmra.mxu0 %v1391
        %v1393 = vpop.f32.mrf.mxu0
        %v1394 = vadd.f32 %v1356, %v1393
        %v1395 = vand.u32 %v269, 4294901760
        %1396 = vmatmul.f32.gmra.mxu0 %v1395
        %v1397 = vpop.f32.mrf.mxu0
        %v1398 = vadd.f32 %v1364, %v1397
        %1399 = vdwg.mxu0
        %1400 = vmatpush.msra.mxu0 0.0
        %1401 = vmatpush.msra.mxu0 0.0
        %1402 = vmatpush.msra.mxu0 0.0
        %1403 = vmatpush.msra.mxu0 0.0
        %1404 = vmatpush.msra.mxu0 0.0
        %1405 = vmatpush.msra.mxu0 0.0
        %1406 = vmatpush.msra.mxu0 0.0
        %1407 = vmatpush.msra.mxu0 0.0
        %1408 = vmatpush.msra.mxu0 0.0
        %1409 = vmatpush.msra.mxu0 0.0
        %1410 = vmatpush.msra.mxu0 0.0
        %1411 = vmatpush.msra.mxu0 0.0
        %1412 = vmatpush.msra.mxu0 0.0
        %1413 = vmatpush.msra.mxu0 0.0
        %1414 = vmatpush.msra.mxu0 0.0
        %v1415 = vand.u32 %v282, 4294901760
        %v1416 = vsub.f32 %v282, %v1415
        %1417 = vmatpush.msra.mxu0 %v1416
        %v1418 = vand.u32 %v263, 4294901760
        %v1419 = vsub.f32 %v263, %v1418
        %1420 = vmatmul.f32.gmra.mxu0 %v1419
        %v1421 = vpop.f32.mrf.mxu0
        %v1422 = vadd.f32 %v1390, %v1421
        %v1423 = vand.u32 %v266, 4294901760
        %v1424 = vsub.f32 %v266, %v1423
        %1425 = vmatmul.f32.gmra.mxu0 %v1424
        %v1426 = vpop.f32.mrf.mxu0
        %v1427 = vadd.f32 %v1394, %v1426
        %v1428 = vand.u32 %v269, 4294901760
        %v1429 = vsub.f32 %v269, %v1428
        %1430 = vmatmul.f32.gmra.mxu0 %v1429
        %v1431 = vpop.f32.mrf.mxu0
        %v1432 = vadd.f32 %v1398, %v1431
        %1433 = vdwg.mxu0
        %1434 = vmatpush.msra.mxu0 0.0
        %1435 = vmatpush.msra.mxu0 0.0
        %1436 = vmatpush.msra.mxu0 0.0
        %1437 = vmatpush.msra.mxu0 0.0
        %1438 = vmatpush.msra.mxu0 0.0
        %1439 = vmatpush.msra.mxu0 0.0
        %1440 = vmatpush.msra.mxu0 0.0
        %1441 = vmatpush.msra.mxu0 0.0
        %1442 = vmatpush.msra.mxu0 0.0
        %1443 = vmatpush.msra.mxu0 0.0
        %1444 = vmatpush.msra.mxu0 0.0
        %1445 = vmatpush.msra.mxu0 0.0
        %1446 = vmatpush.msra.mxu0 0.0
        %1447 = vmatpush.msra.mxu0 0.0
        %1448 = vmatpush.msra.mxu0 0.0
        %v1449 = vand.u32 %v282, 4294901760
        %1450 = vmatpush.msra.mxu0 %v1449
        %v1451 = vand.u32 %v263, 4294901760
        %v1452 = vsub.f32 %v263, %v1451
        %v1453 = vand.u32 %v1452, 4294901760
        %1454 = vmatmul.f32.gmra.mxu0 %v1453
        %v1455 = vpop.f32.mrf.mxu0
        %v1456 = vadd.f32 %v1422, %v1455
        %v1457 = vand.u32 %v266, 4294901760
        %v1458 = vsub.f32 %v266, %v1457
        %v1459 = vand.u32 %v1458, 4294901760
        %1460 = vmatmul.f32.gmra.mxu0 %v1459
        %v1461 = vpop.f32.mrf.mxu0
        %v1462 = vadd.f32 %v1427, %v1461
        %v1463 = vand.u32 %v269, 4294901760
        %v1464 = vsub.f32 %v269, %v1463
        %v1465 = vand.u32 %v1464, 4294901760
        %1466 = vmatmul.f32.gmra.mxu0 %v1465
        %v1467 = vpop.f32.mrf.mxu0
        %v1468 = vadd.f32 %v1432, %v1467
        %1469 = vdwg.mxu0
        %1470 = vmatpush.msra.mxu0 0.0
        %1471 = vmatpush.msra.mxu0 0.0
        %1472 = vmatpush.msra.mxu0 0.0
        %1473 = vmatpush.msra.mxu0 0.0
        %1474 = vmatpush.msra.mxu0 0.0
        %1475 = vmatpush.msra.mxu0 0.0
        %1476 = vmatpush.msra.mxu0 0.0
        %1477 = vmatpush.msra.mxu0 0.0
        %1478 = vmatpush.msra.mxu0 0.0
        %1479 = vmatpush.msra.mxu0 0.0
        %1480 = vmatpush.msra.mxu0 0.0
        %1481 = vmatpush.msra.mxu0 0.0
        %1482 = vmatpush.msra.mxu0 0.0
        %1483 = vmatpush.msra.mxu0 0.0
        %1484 = vmatpush.msra.mxu0 0.0
        %v1485 = vand.u32 %v282, 4294901760
        %v1486 = vsub.f32 %v282, %v1485
        %v1487 = vand.u32 %v1486, 4294901760
        %1488 = vmatpush.msra.mxu0 %v1487
        %v1489 = vand.u32 %v263, 4294901760
        %1490 = vmatmul.f32.gmra.mxu0 %v1489
        %v1491 = vpop.f32.mrf.mxu0
        %v1492 = vadd.f32 %v1456, %v1491
        %v1493 = vand.u32 %v266, 4294901760
        %1494 = vmatmul.f32.gmra.mxu0 %v1493
        %v1495 = vpop.f32.mrf.mxu0
        %v1496 = vadd.f32 %v1462, %v1495
        %v1497 = vand.u32 %v269, 4294901760
        %1498 = vmatmul.f32.gmra.mxu0 %v1497
        %v1499 = vpop.f32.mrf.mxu0
        %v1500 = vadd.f32 %v1468, %v1499
        %1501 = vdwg.mxu0
        %1502 = vmatpush.msra.mxu0 0.0
        %1503 = vmatpush.msra.mxu0 0.0
        %1504 = vmatpush.msra.mxu0 0.0
        %1505 = vmatpush.msra.mxu0 0.0
        %1506 = vmatpush.msra.mxu0 0.0
        %1507 = vmatpush.msra.mxu0 0.0
        %1508 = vmatpush.msra.mxu0 0.0
        %1509 = vmatpush.msra.mxu0 0.0
        %1510 = vmatpush.msra.mxu0 0.0
        %1511 = vmatpush.msra.mxu0 0.0
        %1512 = vmatpush.msra.mxu0 0.0
        %1513 = vmatpush.msra.mxu0 0.0
        %1514 = vmatpush.msra.mxu0 0.0
        %1515 = vmatpush.msra.mxu0 0.0
        %1516 = vmatpush.msra.mxu0 0.0
        %v1517 = vand.u32 %v282, 4294901760
        %1518 = vmatpush.msra.mxu0 %v1517
        %v1519 = vand.u32 %v263, 4294901760
        %1520 = vmatmul.f32.gmra.mxu0 %v1519
        %v1521 = vpop.f32.mrf.mxu0
        %v1522 = vadd.f32 %v1492, %v1521
        %v1523 = vand.u32 %v266, 4294901760
        %1524 = vmatmul.f32.gmra.mxu0 %v1523
        %v1525 = vpop.f32.mrf.mxu0
        %v1526 = vadd.f32 %v1496, %v1525
        %v1527 = vand.u32 %v269, 4294901760
        %1528 = vmatmul.f32.gmra.mxu0 %v1527
        %v1529 = vpop.f32.mrf.mxu0
        %v1530 = vadd.f32 %v1500, %v1529
        %1531 = vdwg.mxu0
        %v1532 = vld [vmem:[#allocation2] sm:$0xff]
        %v1533 = vld [vmem:[#allocation2 + $0x8] sm:$0xff]
        %v1534 = vld [vmem:[#allocation2 + $0x10] sm:$0xff]
        %v1535 = vld [vmem:[#allocation2 + $0x18] sm:$0xff]
        %v1536 = vld [vmem:[#allocation2 + $0x20] sm:$0xff]
        %v1537 = vld [vmem:[#allocation2 + $0x28] sm:$0xff]
        %v1538 = vld [vmem:[#allocation2 + $0x30] sm:$0xff]
        %v1539 = vld [vmem:[#allocation2 + $0x38] sm:$0xff]
        %v1540 = vld [vmem:[#allocation2 + $0x40] sm:$0xff]
        %v1541 = vld [vmem:[#allocation2 + $0x48] sm:$0xff]
        %v1542 = vld [vmem:[#allocation2 + $0x50] sm:$0xff]
        %v1543 = vld [vmem:[#allocation2 + $0x58] sm:$0xff]
        %v1544 = vld [vmem:[#allocation2 + $0x60] sm:$0xff]
        %v1545 = vld [vmem:[#allocation2 + $0x68] sm:$0xff]
        %v1546 = vld [vmem:[#allocation2 + $0x70] sm:$0xff]
        %v1547 = vld [vmem:[#allocation2 + $0x78] sm:$0xff]
        %v1548 = vld [vmem:[#allocation2 + $0x80] sm:$0xff]
        %v1549 = vld [vmem:[#allocation2 + $0x88] sm:$0xff]
        %v1550 = vadd.f32 %v482, %v1532
        %v1551 = vadd.f32 %v690, %v1533
        %v1552 = vadd.f32 %v898, %v1534
        %v1553 = vadd.f32 %v1106, %v1535
        %v1554 = vadd.f32 %v1314, %v1536
        %v1555 = vadd.f32 %v1522, %v1537
        %v1556 = vadd.f32 %v486, %v1538
        %v1557 = vadd.f32 %v694, %v1539
        %v1558 = vadd.f32 %v902, %v1540
        %v1559 = vadd.f32 %v1110, %v1541
        %v1560 = vadd.f32 %v1318, %v1542
        %v1561 = vadd.f32 %v1526, %v1543
        %v1562 = vadd.f32 %v490, %v1544
        %v1563 = vadd.f32 %v698, %v1545
        %v1564 = vadd.f32 %v906, %v1546
        %v1565 = vadd.f32 %v1114, %v1547
        %v1566 = vadd.f32 %v1322, %v1548
        %v1567 = vadd.f32 %v1530, %v1549
        %v1568 = vadd.f32 %v1550, %v1551
        %v1569 = vadd.f32 %v1568, %v1552
        %v1570 = vadd.f32 %v1569, %v1553
        %v1571 = vadd.f32 %v1570, %v1554
        %v1572 = vadd.f32 %v1571, %v1555
        %1573 = vadd.xlane.f32.xlu0 %v1572
        %v1574 = vpop.xlane.xlu0 %1573
        %v1575 = vadd.f32 %v1556, %v1557
        %v1576 = vadd.f32 %v1575, %v1558
        %v1577 = vadd.f32 %v1576, %v1559
        %v1578 = vadd.f32 %v1577, %v1560
        %v1579 = vadd.f32 %v1578, %v1561
        %1580 = vadd.xlane.f32.xlu0 %v1579
        %v1581 = vpop.xlane.xlu0 %1580
        %v1582 = vadd.f32 %v1562, %v1563
        %v1583 = vadd.f32 %v1582, %v1564
        %v1584 = vadd.f32 %v1583, %v1565
        %v1585 = vadd.f32 %v1584, %v1566
        %v1586 = vadd.f32 %v1585, %v1567
        %1587 = vadd.xlane.f32.xlu0 %v1586
        %v1588 = vpop.xlane.xlu0 %1587
        %v1589 = vrcp.pop 768.0
        %v1590 = vmul.f32 768.0, %v1589
        %v1591 = vsub.f32 1.0, %v1590
        %v1592 = vmul.f32 %v1589, %v1591
        %v1593 = vadd.f32 %v1589, %v1592
        %vm1594 = vweird.f32 %v1589
        %v1595 = vsel %vm1594, %v1589, %v1593
        %v1596 = vmul.f32 %v1574, %v1595
        %v1597 = vmul.f32 %v1581, %v1595
        %v1598 = vmul.f32 %v1588, %v1595
        %v1599 = vsub.f32 %v1550, %v1596
        %v1600 = vsub.f32 %v1551, %v1596
        %v1601 = vsub.f32 %v1552, %v1596
        %v1602 = vsub.f32 %v1553, %v1596
        %v1603 = vsub.f32 %v1554, %v1596
        %v1604 = vsub.f32 %v1555, %v1596
        %v1605 = vsub.f32 %v1556, %v1597
        %v1606 = vsub.f32 %v1557, %v1597
        %v1607 = vsub.f32 %v1558, %v1597
        %v1608 = vsub.f32 %v1559, %v1597
        %v1609 = vsub.f32 %v1560, %v1597
        %v1610 = vsub.f32 %v1561, %v1597
        %v1611 = vsub.f32 %v1562, %v1598
        %v1612 = vsub.f32 %v1563, %v1598
        %v1613 = vsub.f32 %v1564, %v1598
        %v1614 = vsub.f32 %v1565, %v1598
        %v1615 = vsub.f32 %v1566, %v1598
        %v1616 = vsub.f32 %v1567, %v1598
        %v1617 = vmul.f32 %v1599, %v1599
        %v1618 = vmul.f32 %v1600, %v1600
        %v1619 = vmul.f32 %v1601, %v1601
        %v1620 = vmul.f32 %v1602, %v1602
        %v1621 = vmul.f32 %v1603, %v1603
        %v1622 = vmul.f32 %v1604, %v1604
        %v1623 = vmul.f32 %v1605, %v1605
        %v1624 = vmul.f32 %v1606, %v1606
        %v1625 = vmul.f32 %v1607, %v1607
        %v1626 = vmul.f32 %v1608, %v1608
        %v1627 = vmul.f32 %v1609, %v1609
        %v1628 = vmul.f32 %v1610, %v1610
        %v1629 = vmul.f32 %v1611, %v1611
        %v1630 = vmul.f32 %v1612, %v1612
        %v1631 = vmul.f32 %v1613, %v1613
        %v1632 = vmul.f32 %v1614, %v1614
        %v1633 = vmul.f32 %v1615, %v1615
        %v1634 = vmul.f32 %v1616, %v1616
        %v1635 = vadd.f32 %v1617, %v1618
        %v1636 = vadd.f32 %v1635, %v1619
        %v1637 = vadd.f32 %v1636, %v1620
        %v1638 = vadd.f32 %v1637, %v1621
        %v1639 = vadd.f32 %v1638, %v1622
        %1640 = vadd.xlane.f32.xlu0 %v1639
        %v1641 = vpop.xlane.xlu0 %1640
        %v1642 = vadd.f32 %v1623, %v1624
        %v1643 = vadd.f32 %v1642, %v1625
        %v1644 = vadd.f32 %v1643, %v1626
        %v1645 = vadd.f32 %v1644, %v1627
        %v1646 = vadd.f32 %v1645, %v1628
        %1647 = vadd.xlane.f32.xlu0 %v1646
        %v1648 = vpop.xlane.xlu0 %1647
        %v1649 = vadd.f32 %v1629, %v1630
        %v1650 = vadd.f32 %v1649, %v1631
        %v1651 = vadd.f32 %v1650, %v1632
        %v1652 = vadd.f32 %v1651, %v1633
        %v1653 = vadd.f32 %v1652, %v1634
        %1654 = vadd.xlane.f32.xlu0 %v1653
        %v1655 = vpop.xlane.xlu0 %1654
        %v1656 = vmul.f32 %v1641, %v1595
        %v1657 = vmul.f32 %v1648, %v1595
        %v1658 = vmul.f32 %v1655, %v1595
        %v1659 = vadd.f32 %v1656, 1e-12
        %v1660 = vadd.f32 %v1657, 1e-12
        %v1661 = vadd.f32 %v1658, 1e-12
        %v1662 = vrsqrt.pop %v1659
        %v1663 = vmul.f32 %v1662, %v1659
        %v1664 = vmul.f32 %v1663, %v1662
        %v1665 = vmul.f32 0.5, %v1664
        %v1666 = vsub.f32 1.5, %v1665
        %v1667 = vmul.f32 %v1662, %v1666
        %vm1668 = vweird.f32 %v1659
        %vm1669 = vweird.f32 %v1662
        %vm1670 = vmor %vm1668, %vm1669
        %v1671 = vsel %vm1670, %v1662, %v1667
        %v1672 = vrsqrt.pop %v1660
        %v1673 = vmul.f32 %v1672, %v1660
        %v1674 = vmul.f32 %v1673, %v1672
        %v1675 = vmul.f32 0.5, %v1674
        %v1676 = vsub.f32 1.5, %v1675
        %v1677 = vmul.f32 %v1672, %v1676
        %vm1678 = vweird.f32 %v1660
        %vm1679 = vweird.f32 %v1672
        %vm1680 = vmor %vm1678, %vm1679
        %v1681 = vsel %vm1680, %v1672, %v1677
        %v1682 = vrsqrt.pop %v1661
        %v1683 = vmul.f32 %v1682, %v1661
        %v1684 = vmul.f32 %v1683, %v1682
        %v1685 = vmul.f32 0.5, %v1684
        %v1686 = vsub.f32 1.5, %v1685
        %v1687 = vmul.f32 %v1682, %v1686
        %vm1688 = vweird.f32 %v1661
        %vm1689 = vweird.f32 %v1682
        %vm1690 = vmor %vm1688, %vm1689
        %v1691 = vsel %vm1690, %v1682, %v1687
        %v1692 = vmul.f32 %v1599, %v1671
        %v1693 = vmul.f32 %v1600, %v1671
        %v1694 = vmul.f32 %v1601, %v1671
        %v1695 = vmul.f32 %v1602, %v1671
        %v1696 = vmul.f32 %v1603, %v1671
        %v1697 = vmul.f32 %v1604, %v1671
        %v1698 = vmul.f32 %v1605, %v1681
        %v1699 = vmul.f32 %v1606, %v1681
        %v1700 = vmul.f32 %v1607, %v1681
        %v1701 = vmul.f32 %v1608, %v1681
        %v1702 = vmul.f32 %v1609, %v1681
        %v1703 = vmul.f32 %v1610, %v1681
        %v1704 = vmul.f32 %v1611, %v1691
        %v1705 = vmul.f32 %v1612, %v1691
        %v1706 = vmul.f32 %v1613, %v1691
        %v1707 = vmul.f32 %v1614, %v1691
        %v1708 = vmul.f32 %v1615, %v1691
        %v1709 = vmul.f32 %v1616, %v1691
        %v1710 = vld [vmem:[%s3] ss:$2 sm:$0x3f]
        %v1712 = vperm.slane %v1710, 0
        %v1713 = vperm.slane %v1710, 1
        %v1714 = vperm.slane %v1710, 2
        %v1715 = vperm.slane %v1710, 3
        %v1716 = vperm.slane %v1710, 4
        %v1717 = vperm.slane %v1710, 5
        %v1724 = vmul.f32 %v1692, %v1712
        %v1725 = vmul.f32 %v1693, %v1713
        %v1726 = vmul.f32 %v1694, %v1714
        %v1727 = vmul.f32 %v1695, %v1715
        %v1728 = vmul.f32 %v1696, %v1716
        %v1729 = vmul.f32 %v1697, %v1717
        %v1730 = vmul.f32 %v1698, %v1712
        %v1731 = vmul.f32 %v1699, %v1713
        %v1732 = vmul.f32 %v1700, %v1714
        %v1733 = vmul.f32 %v1701, %v1715
        %v1734 = vmul.f32 %v1702, %v1716
        %v1735 = vmul.f32 %v1703, %v1717
        %v1736 = vmul.f32 %v1704, %v1712
        %v1737 = vmul.f32 %v1705, %v1713
        %v1738 = vmul.f32 %v1706, %v1714
        %v1739 = vmul.f32 %v1707, %v1715
        %v1740 = vmul.f32 %v1708, %v1716
        %v1741 = vmul.f32 %v1709, %v1717
        %s1742 = scalar_lea.vmem %s3, 1
        %v1743 = vld [vmem:[%s1742] ss:$2 sm:$0x3f]
        %v1745 = vperm.slane %v1743, 0
        %v1746 = vperm.slane %v1743, 1
        %v1747 = vperm.slane %v1743, 2
        %v1748 = vperm.slane %v1743, 3
        %v1749 = vperm.slane %v1743, 4
        %v1750 = vperm.slane %v1743, 5
        %v1757 = vadd.f32 %v1724, %v1745
        %v1758 = vadd.f32 %v1725, %v1746
        %v1759 = vadd.f32 %v1726, %v1747
        %v1760 = vadd.f32 %v1727, %v1748
        %v1761 = vadd.f32 %v1728, %v1749
        %v1762 = vadd.f32 %v1729, %v1750
        %v1763 = vadd.f32 %v1730, %v1745
        %v1764 = vadd.f32 %v1731, %v1746
        %v1765 = vadd.f32 %v1732, %v1747
        %v1766 = vadd.f32 %v1733, %v1748
        %v1767 = vadd.f32 %v1734, %v1749
        %v1768 = vadd.f32 %v1735, %v1750
        %v1769 = vadd.f32 %v1736, %v1745
        %v1770 = vadd.f32 %v1737, %v1746
        %v1771 = vadd.f32 %v1738, %v1747
        %v1772 = vadd.f32 %v1739, %v1748
        %v1773 = vadd.f32 %v1740, %v1749
        %v1774 = vadd.f32 %v1741, %v1750
        %1775 = vst [vmem:[%s220] sm:$0xff] %v1757
        %1776 = vst [vmem:[%s220 + $0x8] sm:$0xff] %v1758
        %1777 = vst [vmem:[%s220 + $0x10] sm:$0xff] %v1759
        %1778 = vst [vmem:[%s220 + $0x18] sm:$0xff] %v1760
        %1779 = vst [vmem:[%s220 + $0x20] sm:$0xff] %v1761
        %1780 = vst [vmem:[%s220 + $0x28] sm:$0xff] %v1762
        %1781 = vst [vmem:[%s220 + $0x30] sm:$0xff] %v1763
        %1782 = vst [vmem:[%s220 + $0x38] sm:$0xff] %v1764
        %1783 = vst [vmem:[%s220 + $0x40] sm:$0xff] %v1765
        %1784 = vst [vmem:[%s220 + $0x48] sm:$0xff] %v1766
        %1785 = vst [vmem:[%s220 + $0x50] sm:$0xff] %v1767
        %1786 = vst [vmem:[%s220 + $0x58] sm:$0xff] %v1768
        %1787 = vst [vmem:[%s220 + $0x60] sm:$0xff] %v1769
        %1788 = vst [vmem:[%s220 + $0x68] sm:$0xff] %v1770
        %1789 = vst [vmem:[%s220 + $0x70] sm:$0xff] %v1771
        %1790 = vst [vmem:[%s220 + $0x78] sm:$0xff] %v1772
        %1791 = vst [vmem:[%s220 + $0x80] sm:$0xff] %v1773
        %1792 = vst [vmem:[%s220 + $0x88] sm:$0xff] %v1774
        %s1793 = sand.u32 %s116, 1
        %s1794 = scalar_lea.sflag [#allocation4], %s1793
        %s1795 = sand.u32 %s116, 1
        %s1796 = smul.addr %s1795, 144
        %s1797 = scalar_lea.vmem [#allocation5], %s1796
        // Predicated region
        $region41: #{tpu_custom_call.1} parent=35 // pred_check
          %p1798 = pneg %p126
        $region42: #{tpu_custom_call.1} parent=35 // pred_check_branch
          %1800 = sbr.rel (%p1798) target = $region44
        $region43: #{tpu_custom_call.1} parent=35 // pred_region
          %s1801 = smul.u32 3, %s19
          %s1802 = ssub.s32 8, %s1801
          %p1803 = scmp.lt.s32.totalorder %s1802, 3
          %s1804 = scalar_select %p1803, %s1802, 3
          %s1805 = smul.u32 8, %s1804
          %s1806 = smul.u32 %s1805, 6
          %s1807 = ssub.s32 144, %s1806
          %s1808 = sshll.u32 %s1807, 4
          %1809 = vsyncadd %s1794, %s1808
          %p1810 = scmp.ne.s32.totalorder 0, %s1806
          %s1811 = smul.addr %s1801, 6
          %s1812 = smul.addr %s1811, 8
          %s1813 = scalar_lea.hbm %s4, %s1812
          %s1814 = smul.u32 48, %s1804
          %s1815 = sshll.u32 %s1797, 4
          %s1816 = int_to_ptr.vmem [resolvable:$true] %s1815
          %s1817 = sshll.u32 %s1813, 4
          %s1818 = int_to_ptr.hbm [resolvable:$true] %s1817
          %s1819 = sshll.u32 %s1814, 4
          %1823 = dma.vmem_to_hbm [thread:$0]  (%p1810), %s1816, %s1819, %s1818, %s1794, 768, 768, 48
        $region44: #{tpu_custom_call.1} parent=35 // pred_fallthru
          _
      $region36: #{tpu_custom_call.1} parent=5 // pred_fallthru
        _
      %p1824 = scmp.le.s32.totalorder 2, %s14
      // Predicated region
      $region45: #{tpu_custom_call.1} parent=5 // pred_check
        %p1825 = pneg %p1824
      $region46: #{tpu_custom_call.1} parent=5 // pred_check_branch
        %1827 = sbr.rel (%p1825) target = $region48
      $region47: #{tpu_custom_call.1} parent=5 // pred_region
        %s1828 = ssub.s32 %s14, 2
        // Predicated region
        $region49: #{tpu_custom_call.1} parent=47 // pred_check
          %p1829 = pneg %p132
        $region50: #{tpu_custom_call.1} parent=47 // pred_check_branch
          %1831 = sbr.rel (%p1829) target = $region52
        $region51: #{tpu_custom_call.1} parent=47 // pred_region
          %s1832 = sand.u32 %s117, 1
          %s1833 = scalar_lea.sflag [#allocation4], %s1832
          %s1834 = sand.u32 %s117, 1
          %s1835 = smul.addr %s1834, 144
          %s1836 = scalar_lea.vmem [#allocation5], %s1835
          %1838 = dma.done %s1833, 2304
        $region52: #{tpu_custom_call.1} parent=47 // pred_fallthru
          _
      $region48: #{tpu_custom_call.1} parent=5 // pred_fallthru
        _
    $region6: #{tpu_custom_call.1} parent=1 // loop_footer
      %s18 = sadd.s32 1, %s14
    $region7: #{tpu_custom_call.1} parent=1 // loop_footer_branch
      %13 = sbr.rel target = $region3
    $region8: #{tpu_custom_call.1} parent=1 // loop_exit
      _
    %1839 = vsyncpa [#allocation3], 1
    %s1840 = scalar_lea.sflag [#allocation3], 1
    %1841 = vsyncpa %s1840, 1
    %1842 = vsyncpa [#allocation4], 1
    %s1843 = scalar_lea.sflag [#allocation4], 1
    %1844 = vsyncpa %s1843, 1

</llo_original>
